<compile_context>
chip_gen: v7x
topology: tpu7x:2x2x1
jax: 0.10.0
libtpu: 0.0.40
codegen_flags: <defaults>
</compile_context>

<pallas_src>
import functools
import math

import jax
import jax.numpy as jnp
from jax import lax
from jax.experimental import pallas as pl
from jax.experimental.pallas import tpu as pltpu


def _mab_kernel(aw_ref, x_ref, mask_ref, wq_ref, wk_ref, wv_ref,
                o_ref, acc_ref, *, tq):
    """Grid = (B, S//TQ, N). N (attention blocks) is the innermost reduction."""
    qi = pl.program_id(1)
    blk = pl.program_id(2)
    n_blk = pl.num_programs(2)

    @pl.when(blk == 0)
    def _():
        acc_ref[...] = jnp.zeros_like(acc_ref)

    # Mixing weight for this block (softmax precomputed in the wrapper, SMEM).
    w_i = aw_ref[blk]

    # bf16 operands for the MXU; f32 accumulation everywhere.
    x_all = x_ref[...].astype(jnp.bfloat16)                    # (S, D)
    q_rows = pl.multiple_of(qi * tq, tq)
    x_q = x_ref[pl.ds(q_rows, tq), :].astype(jnp.bfloat16)     # (TQ, D)
    wq = wq_ref[...].astype(jnp.bfloat16)                      # (D, D)
    wk = wk_ref[...].astype(jnp.bfloat16)
    wv = wv_ref[...].astype(jnp.bfloat16)

    q = jnp.dot(x_q, wq, preferred_element_type=jnp.float32)    # (TQ, D) f32
    k = jnp.dot(x_all, wk, preferred_element_type=jnp.float32)  # (S, D)  f32
    v = jnp.dot(x_all, wv, preferred_element_type=jnp.float32)  # (S, D)  f32

    d = x_ref.shape[-1]
    scale = 1.0 / math.sqrt(d)

    # scores = (Q K^T) * scale + mask     (contract last dims; no transpose op)
    scores = lax.dot_general(
        q.astype(jnp.bfloat16), k.astype(jnp.bfloat16),
        (((1,), (1,)), ((), ())),
        preferred_element_type=jnp.float32,
    ) * scale + mask_ref[...]                                   # (TQ, S) f32

    smax = jnp.max(scores, axis=-1, keepdims=True)
    p = jnp.exp(scores - smax)                                  # f32
    inv = pl.reciprocal(jnp.sum(p, axis=-1, keepdims=True), approx=True)

    attn = jnp.dot(p.astype(jnp.bfloat16), v.astype(jnp.bfloat16),
                   preferred_element_type=jnp.float32)          # (TQ, D) f32

    # Fold softmax normalization and block weight into one scale; accumulate in
    # f32 scratch, write the output tile once on the last block.
    acc_ref[...] += (w_i * inv) * attn

    @pl.when(blk == n_blk - 1)
    def _():
        o_ref[...] = acc_ref[...].astype(o_ref.dtype)


def multi_attention_block(att_weights, xs, wqs, wks, wvs, mask, *, tq=128):
    """att_weights: (N,), xs: (N,B,S,D), w*: (N,D,D), mask: (S,S) additive."""
    n, b, s, d = xs.shape
    assert s % tq == 0 and tq % 8 == 0 and d % 128 == 0 and s % 128 == 0

    # Hoist the block-mixing softmax out of the kernel (runs once, not per step).
    norm_w = jax.nn.softmax(att_weights.astype(jnp.float32), axis=0)

    kernel = functools.partial(_mab_kernel, tq=tq)
    return pl.pallas_call(
        kernel,
        out_shape=jax.ShapeDtypeStruct((b, s, d), jnp.float32),
        grid_spec=pltpu.PrefetchScalarGridSpec(
            num_scalar_prefetch=0,
            grid=(b, s // tq, n),
            in_specs=[
                # normalized block weights, whole vector in SMEM
                pl.BlockSpec(memory_space=pltpu.MemorySpace.SMEM),
                # x for block ki / batch bi: full sequence (K/V need all rows)
                pl.BlockSpec((None, None, s, d), lambda bi, qi, ki: (ki, bi, 0, 0)),
                # additive mask, (TQ, S) slab for this query tile
                pl.BlockSpec((tq, s), lambda bi, qi, ki: (qi, 0)),
                # per-block projection weights
                pl.BlockSpec((None, d, d), lambda bi, qi, ki: (ki, 0, 0)),
                pl.BlockSpec((None, d, d), lambda bi, qi, ki: (ki, 0, 0)),
                pl.BlockSpec((None, d, d), lambda bi, qi, ki: (ki, 0, 0)),
            ],
            out_specs=pl.BlockSpec((None, tq, d), lambda bi, qi, ki: (bi, qi, 0)),
            scratch_shapes=[pltpu.VMEM((tq, d), jnp.float32)],
        ),
        compiler_params=pltpu.CompilerParams(
            dimension_semantics=("parallel", "parallel", "arbitrary"),
        ),
    )(norm_w, xs, mask, wqs, wks, wvs)


def _reference(att_weights, xs, wqs, wks, wvs, mask):
    """Pure-JAX f32 reference mirroring the PyTorch forward."""
    norm_w = jax.nn.softmax(att_weights, axis=0)
    n, _, _, d = xs.shape
    result = None
    for i in range(n):
        x = xs[i]
        q = x @ wqs[i]
        k = x @ wks[i]
        v = x @ wvs[i]
        scores = jnp.einsum("bqd,bkd->bqk", q, k) / jnp.sqrt(jnp.float32(d))
        scores = scores + mask[None, :, :]
        p = jax.nn.softmax(scores, axis=-1)
        out = jnp.einsum("bqk,bkd->bqd", p, v) * norm_w[i]
        result = out if result is None else result + out
    return result


if __name__ == "__main__":
    N_BLOCKS, B, S, D = 3, 2, 256, 128
    TQ = 128

    key = jax.random.PRNGKey(0)
    kx, kq, kk, kv = jax.random.split(key, 4)

    # module __init__: attention_weights = [1/N] * N
    att_weights = jnp.full((N_BLOCKS,), 1.0 / N_BLOCKS, dtype=jnp.float32)

    xs = jax.random.normal(kx, (N_BLOCKS, B, S, D), dtype=jnp.float32)
    wqs = jax.random.normal(kq, (N_BLOCKS, D, D), dtype=jnp.float32) * 0.1
    wks = jax.random.normal(kk, (N_BLOCKS, D, D), dtype=jnp.float32) * 0.1
    wvs = jax.random.normal(kv, (N_BLOCKS, D, D), dtype=jnp.float32) * 0.1

    # deterministic additive causal mask, (S, S), broadcast over batch
    mask = jnp.where(
        jnp.arange(S)[:, None] >= jnp.arange(S)[None, :], 0.0, -1e9
    ).astype(jnp.float32)

    out = multi_attention_block(att_weights, xs, wqs, wks, wvs, mask, tq=TQ)
    out = jax.block_until_ready(out)

    ref = _reference(att_weights, xs, wqs, wks, wvs, mask)
    assert out.shape == (B, S, D)
    max_err = jnp.max(jnp.abs(out - ref))
    # bf16 MXU operands + approx reciprocal -> loose-but-meaningful tolerance.
    assert jnp.allclose(out, ref, atol=5e-2, rtol=5e-2), f"max abs err {max_err}"
    print("KERNEL_OK")
</pallas_src>

<mosaic_0001>
module attributes {stable_mosaic.version = 11 : i64} {
  func.func @_mab_kernel(%arg0: i32, %arg1: i32, %arg2: i32, %arg3: memref<3xf32, #tpu.memory_space<smem>>, %arg4: memref<1x1x256x128xf32, #tpu.memory_space<vmem>>, %arg5: memref<128x256xf32, #tpu.memory_space<vmem>>, %arg6: memref<1x128x128xf32, #tpu.memory_space<vmem>>, %arg7: memref<1x128x128xf32, #tpu.memory_space<vmem>>, %arg8: memref<1x128x128xf32, #tpu.memory_space<vmem>>, %arg9: memref<1x128x128xf32, #tpu.memory_space<vmem>>, %arg10: memref<128x128xf32, #tpu.memory_space<vmem>>) attributes {dimension_semantics = [#tpu.dimension_semantics<parallel>, #tpu.dimension_semantics<parallel>, #tpu.dimension_semantics<arbitrary>], iteration_bounds = array<i64: 2, 2, 3>, scalar_prefetch = 0 : i64, scratch_operands = 1 : i64, tpu.core_type = #tpu.core_type<tc>, window_params = [{transform_indices = @transform_0, window_bounds = array<i64: 3>}, {transform_indices = @transform_1, window_bounds = array<i64: 1, 1, 256, 128>}, {transform_indices = @transform_2, window_bounds = array<i64: 128, 256>}, {transform_indices = @transform_3, window_bounds = array<i64: 1, 128, 128>}, {transform_indices = @transform_4, window_bounds = array<i64: 1, 128, 128>}, {transform_indices = @transform_5, window_bounds = array<i64: 1, 128, 128>}, {transform_indices = @transform_6, window_bounds = array<i64: 1, 128, 128>}]} {
    %c0_i32 = arith.constant 0 : i32
    %0 = arith.cmpi eq, %arg2, %c0_i32 : i32
    %1 = arith.extui %0 : i1 to i32
    %c0_i32_0 = arith.constant 0 : i32
    %2 = arith.cmpi ne, %1, %c0_i32_0 : i32
    scf.if %2 {
      %cst_30 = arith.constant 0.000000e+00 : f32
      %54 = vector.broadcast %cst_30 : f32 to vector<128x128xf32>
      %c0_31 = arith.constant 0 : index
      %c0_32 = arith.constant 0 : index
      %55 = vector.load %arg10[%c0_31, %c0_32] : memref<128x128xf32, #tpu.memory_space<vmem>>, vector<128x128xf32>
      tpu.vector_store %arg10[%c0_31, %c0_32], %54 {strides = array<i32>} : memref<128x128xf32, #tpu.memory_space<vmem>>, vector<128x128xf32>,
    } else {
    }
    %3 = arith.index_cast %arg2 : i32 to index
    %4 = memref.load %arg3[%3] : memref<3xf32, #tpu.memory_space<smem>>
    %c0 = arith.constant 0 : index
    %c0_1 = arith.constant 0 : index
    %c0_2 = arith.constant 0 : index
    %c0_3 = arith.constant 0 : index
    %5 = vector.load %arg4[%c0, %c0_1, %c0_2, %c0_3] : memref<1x1x256x128xf32, #tpu.memory_space<vmem>>, vector<1x1x256x128xf32>
    %6 = vector.shape_cast %5 : vector<1x1x256x128xf32> to vector<256x128xf32>
    %7 = arith.truncf %6 : vector<256x128xf32> to vector<256x128xbf16>
    %c128_i32 = arith.constant 128 : i32
    %8 = arith.muli %arg1, %c128_i32 : i32
    %9 = tpu.assume_multiple %8, 128 : i32
    %c0_4 = arith.constant 0 : index
    %c0_5 = arith.constant 0 : index
    %10 = arith.index_cast %9 : i32 to index
    %c0_6 = arith.constant 0 : index
    %11 = vector.load %arg4[%c0_4, %c0_5, %10, %c0_6] : memref<1x1x256x128xf32, #tpu.memory_space<vmem>>, vector<1x1x128x128xf32>
    %12 = vector.shape_cast %11 : vector<1x1x128x128xf32> to vector<128x128xf32>
    %13 = arith.truncf %12 : vector<128x128xf32> to vector<128x128xbf16>
    %c0_7 = arith.constant 0 : index
    %c0_8 = arith.constant 0 : index
    %c0_9 = arith.constant 0 : index
    %14 = vector.load %arg6[%c0_7, %c0_8, %c0_9] : memref<1x128x128xf32, #tpu.memory_space<vmem>>, vector<1x128x128xf32>
    %15 = vector.shape_cast %14 : vector<1x128x128xf32> to vector<128x128xf32>
    %16 = arith.truncf %15 : vector<128x128xf32> to vector<128x128xbf16>
    %c0_10 = arith.constant 0 : index
    %c0_11 = arith.constant 0 : index
    %c0_12 = arith.constant 0 : index
    %17 = vector.load %arg7[%c0_10, %c0_11, %c0_12] : memref<1x128x128xf32, #tpu.memory_space<vmem>>, vector<1x128x128xf32>
    %18 = vector.shape_cast %17 : vector<1x128x128xf32> to vector<128x128xf32>
    %19 = arith.truncf %18 : vector<128x128xf32> to vector<128x128xbf16>
    %c0_13 = arith.constant 0 : index
    %c0_14 = arith.constant 0 : index
    %c0_15 = arith.constant 0 : index
    %20 = vector.load %arg8[%c0_13, %c0_14, %c0_15] : memref<1x128x128xf32, #tpu.memory_space<vmem>>, vector<1x128x128xf32>
    %21 = vector.shape_cast %20 : vector<1x128x128xf32> to vector<128x128xf32>
    %22 = arith.truncf %21 : vector<128x128xf32> to vector<128x128xbf16>
    %cst = arith.constant dense<0.000000e+00> : vector<128x128xf32>
    %23 = tpu.matmul %13, %16, %cst {dimension_numbers = #tpu.dot_dimension_numbers<[1], [0], [0], [1], [0, 0, 1, 1], [], []>} : vector<128x128xbf16>, vector<128x128xbf16>, vector<128x128xf32> -> vector<128x128xf32>
    %cst_16 = arith.constant dense<0.000000e+00> : vector<256x128xf32>
    %24 = tpu.matmul %7, %19, %cst_16 {dimension_numbers = #tpu.dot_dimension_numbers<[1], [0], [0], [1], [0, 0, 1, 1], [], []>} : vector<256x128xbf16>, vector<128x128xbf16>, vector<256x128xf32> -> vector<256x128xf32>
    %cst_17 = arith.constant dense<0.000000e+00> : vector<256x128xf32>
    %25 = tpu.matmul %7, %22, %cst_17 {dimension_numbers = #tpu.dot_dimension_numbers<[1], [0], [0], [1], [0, 0, 1, 1], [], []>} : vector<256x128xbf16>, vector<128x128xbf16>, vector<256x128xf32> -> vector<256x128xf32>
    %26 = arith.truncf %23 : vector<128x128xf32> to vector<128x128xbf16>
    %27 = arith.truncf %24 : vector<256x128xf32> to vector<256x128xbf16>
    %cst_18 = arith.constant dense<0.000000e+00> : vector<128x256xf32>
    %28 = tpu.matmul %26, %27, %cst_18 {dimension_numbers = #tpu.dot_dimension_numbers<[1], [1], [0], [0], [0, 0, 1, 0], [], []>} : vector<128x128xbf16>, vector<256x128xbf16>, vector<128x256xf32> -> vector<128x256xf32>
    %cst_19 = arith.constant 0.0883883461 : f32
    %29 = vector.broadcast %cst_19 : f32 to vector<128x256xf32>
    %30 = arith.mulf %28, %29 : vector<128x256xf32>
    %c0_20 = arith.constant 0 : index
    %c0_21 = arith.constant 0 : index
    %31 = vector.load %arg5[%c0_20, %c0_21] : memref<128x256xf32, #tpu.memory_space<vmem>>, vector<128x256xf32>
    %32 = arith.addf %30, %31 : vector<128x256xf32>
    %cst_22 = arith.constant dense<0xFF800000> : vector<128xf32>
    %33 = vector.multi_reduction <maximumf>, %32, %cst_22 [1] : vector<128x256xf32> to vector<128xf32>
    %34 = vector.shape_cast %33 : vector<128xf32> to vector<128x1xf32>
    %35 = vector.broadcast %34 : vector<128x1xf32> to vector<128x256xf32>
    %36 = arith.subf %32, %35 : vector<128x256xf32>
    %37 = math.exp %36 : vector<128x256xf32>
    %cst_23 = arith.constant dense<0.000000e+00> : vector<128xf32>
    %38 = vector.multi_reduction <add>, %37, %cst_23 [1] : vector<128x256xf32> to vector<128xf32>
    %39 = vector.shape_cast %38 : vector<128xf32> to vector<128x1xf32>
    %40 = tpu.reciprocal %39 {approx = true} : vector<128x1xf32> -> vector<128x1xf32>
    %41 = arith.truncf %37 : vector<128x256xf32> to vector<128x256xbf16>
    %42 = arith.truncf %25 : vector<256x128xf32> to vector<256x128xbf16>
    %cst_24 = arith.constant dense<0.000000e+00> : vector<128x128xf32>
    %43 = tpu.matmul %41, %42, %cst_24 {dimension_numbers = #tpu.dot_dimension_numbers<[1], [0], [0], [1], [0, 0, 1, 1], [], []>} : vector<128x256xbf16>, vector<256x128xbf16>, vector<128x128xf32> -> vector<128x128xf32>
    %c0_25 = arith.constant 0 : index
    %c0_26 = arith.constant 0 : index
    %44 = vector.load %arg10[%c0_25, %c0_26] : memref<128x128xf32, #tpu.memory_space<vmem>>, vector<128x128xf32>
    %45 = vector.broadcast %4 : f32 to vector<128x1xf32>
    %46 = arith.mulf %45, %40 : vector<128x1xf32>
    %47 = vector.broadcast %46 : vector<128x1xf32> to vector<128x128xf32>
    %48 = arith.mulf %47, %43 : vector<128x128xf32>
    %49 = arith.addf %44, %48 : vector<128x128xf32>
    %c0_27 = arith.constant 0 : index
    %c0_28 = arith.constant 0 : index
    %50 = vector.load %arg10[%c0_27, %c0_28] : memref<128x128xf32, #tpu.memory_space<vmem>>, vector<128x128xf32>
    tpu.vector_store %arg10[%c0_27, %c0_28], %49 {strides = array<i32>} : memref<128x128xf32, #tpu.memory_space<vmem>>, vector<128x128xf32>,
    %c2_i32 = arith.constant 2 : i32
    %51 = arith.cmpi eq, %arg2, %c2_i32 : i32
    %52 = arith.extui %51 : i1 to i32
    %c0_i32_29 = arith.constant 0 : i32
    %53 = arith.cmpi ne, %52, %c0_i32_29 : i32
    scf.if %53 {
      %c0_30 = arith.constant 0 : index
      %c0_31 = arith.constant 0 : index
      %54 = vector.load %arg10[%c0_30, %c0_31] : memref<128x128xf32, #tpu.memory_space<vmem>>, vector<128x128xf32>
      %c0_32 = arith.constant 0 : index
      %c0_33 = arith.constant 0 : index
      %c0_34 = arith.constant 0 : index
      %55 = vector.load %arg9[%c0_32, %c0_33, %c0_34] : memref<1x128x128xf32, #tpu.memory_space<vmem>>, vector<1x128x128xf32>
      %56 = vector.shape_cast %55 : vector<1x128x128xf32> to vector<128x128xf32>
      %57 = vector.shape_cast %54 : vector<128x128xf32> to vector<1x128x128xf32>
      tpu.vector_store %arg9[%c0_32, %c0_33, %c0_34], %57 {strides = array<i32>} : memref<1x128x128xf32, #tpu.memory_space<vmem>>, vector<1x128x128xf32>,
    } else {
    }
    return
  }
  func.func @transform_0(%arg0: i32, %arg1: i32, %arg2: i32) -> i32 {
    %c0_i32 = arith.constant 0 : i32
    %c0_i32_0 = arith.constant 0 : i32
    return %c0_i32 : i32
  }
  func.func @transform_1(%arg0: i32, %arg1: i32, %arg2: i32) -> (i32, i32, i32, i32) {
    %c0_i32 = arith.constant 0 : i32
    %c0_i32_0 = arith.constant 0 : i32
    %c0_i32_1 = arith.constant 0 : i32
    return %arg2, %arg0, %c0_i32, %c0_i32_0 : i32, i32, i32, i32
  }
  func.func @transform_2(%arg0: i32, %arg1: i32, %arg2: i32) -> (i32, i32) {
    %c0_i32 = arith.constant 0 : i32
    %c0_i32_0 = arith.constant 0 : i32
    return %arg1, %c0_i32 : i32, i32
  }
  func.func @transform_3(%arg0: i32, %arg1: i32, %arg2: i32) -> (i32, i32, i32) {
    %c0_i32 = arith.constant 0 : i32
    %c0_i32_0 = arith.constant 0 : i32
    %c0_i32_1 = arith.constant 0 : i32
    return %arg2, %c0_i32, %c0_i32_0 : i32, i32, i32
  }
  func.func @transform_4(%arg0: i32, %arg1: i32, %arg2: i32) -> (i32, i32, i32) {
    %c0_i32 = arith.constant 0 : i32
    %c0_i32_0 = arith.constant 0 : i32
    %c0_i32_1 = arith.constant 0 : i32
    return %arg2, %c0_i32, %c0_i32_0 : i32, i32, i32
  }
  func.func @transform_5(%arg0: i32, %arg1: i32, %arg2: i32) -> (i32, i32, i32) {
    %c0_i32 = arith.constant 0 : i32
    %c0_i32_0 = arith.constant 0 : i32
    %c0_i32_1 = arith.constant 0 : i32
    return %arg2, %c0_i32, %c0_i32_0 : i32, i32, i32
  }
  func.func @transform_6(%arg0: i32, %arg1: i32, %arg2: i32) -> (i32, i32, i32) {
    %c0_i32 = arith.constant 0 : i32
    %c0_i32_0 = arith.constant 0 : i32
    return %arg0, %arg1, %c0_i32 : i32, i32, i32
  }
}

</mosaic_0001>

<llo_original>
// kernel: tpu_custom_call.1
$region0: #{tpu_custom_call.1}
  #allocation0 [shape = 'u32[]', space=smem, size = 0x4, offset = 0x4, fixed_abs, tag = 'smem constant byte address 0x4 - core index']
  #allocation1 [shape = 'u32[144,128]{1,0:T(1,128)}', space=vmem, size = 0x12000, scoped, tag = 'internal scratch']
  #allocation2 [shape = 'f32[128,128]{1,0:T(8,128)}', space=vmem, size = 0x10000, scoped, tag = 'scratch operand']
  %s0 = inlined_call_operand.hbm [shape: f32[3], index: 0, kind: input, shape index: {}]
  %s1 = inlined_call_operand.hbm [shape: f32[3,2,256,128], index: 1, kind: input, shape index: {}]
  %s2 = inlined_call_operand.hbm [shape: f32[256,256], index: 2, kind: input, shape index: {}]
  %s3 = inlined_call_operand.hbm [shape: f32[3,128,128], index: 3, kind: input, shape index: {}]
  %s4 = inlined_call_operand.hbm [shape: f32[3,128,128], index: 4, kind: input, shape index: {}]
  %s5 = inlined_call_operand.hbm [shape: f32[3,128,128], index: 5, kind: input, shape index: {}]
  %s6 = inlined_call_operand.hbm [shape: f32[2,256,128], index: 6, kind: output, shape index: {}]
  %s7 = sld [smem:[#allocation0]]
  $region89: #{tpu_custom_call.1} parent=0
    _
  %s9 = ssub.s32 1, %s7
  %s10 = scalar_select 0, %s9, %s7
  $region1: #{tpu_custom_call.1} parent=0
    #allocation3 [shape = 'u8[512]{0}', space=smem, size = 0x200, scoped, tag = 'input window, operand 0, single buffered']
    #allocation4 [shape = 's32[2]{0}', space=sflag, size = 0x8, scoped, tag = 'scoped memory for tpu_custom_call.1']
    #allocation5 [shape = 's32[2]{0}', space=sflag, size = 0x8, scoped, tag = 'scoped memory for tpu_custom_call.1']
    #allocation6 [shape = 's32[2]{0}', space=sflag, size = 0x8, scoped, tag = 'scoped memory for tpu_custom_call.1']
    #allocation7 [shape = 'u8[262144]{0}', space=vmem, size = 0x40000, scoped, tag = 'input window, operand 1']
    #allocation8 [shape = 'u8[262144]{0}', space=vmem, size = 0x40000, scoped, tag = 'input window, operand 2']
    #allocation9 [shape = 's32[2]{0}', space=sflag, size = 0x8, scoped, tag = 'scoped memory for tpu_custom_call.1']
    #allocation10 [shape = 'u8[131072]{0}', space=vmem, size = 0x20000, scoped, tag = 'input window, operand 3']
    #allocation11 [shape = 'u8[131072]{0}', space=vmem, size = 0x20000, scoped, tag = 'input window, operand 4']
    #allocation12 [shape = 's32[2]{0}', space=sflag, size = 0x8, scoped, tag = 'scoped memory for tpu_custom_call.1']
    #allocation13 [shape = 'u8[131072]{0}', space=vmem, size = 0x20000, scoped, tag = 'input window, operand 5']
    #allocation14 [shape = 'u8[131072]{0}', space=vmem, size = 0x20000, scoped, tag = 'output window, operand 0']
    %11 = vsyncpa [#allocation6], 0
    %12 = vsyncpa [#allocation4], 0
    %s13 = scalar_lea.sflag [#allocation4], 1
    %14 = vsyncpa %s13, 0
    %15 = vsyncpa [#allocation9], 0
    %s16 = scalar_lea.sflag [#allocation9], 1
    %17 = vsyncpa %s16, 0
    %18 = vsyncpa [#allocation12], 0
    %s19 = scalar_lea.sflag [#allocation12], 1
    %20 = vsyncpa %s19, 0
    %21 = vsyncpa [#allocation5], 0
    %s22 = scalar_lea.sflag [#allocation5], 1
    %23 = vsyncpa %s22, 0
    loop: start=0, step=1, limit=14
    $region2: #{tpu_custom_call.1} parent=1 // loop_pre_header
      _
    $region3: #{tpu_custom_call.1} parent=1 // loop_header
      %s25 = sphi 0, %s29
      %p26 = scmp.ge.s32.totalorder %s25, 14
      %s32 = sphi 0, %s51
      %s33 = sphi 0, %s47
      %s34 = sphi 0, %s43
      %s35 = sphi 0, %s32
      %s36 = sphi 0, %s33
      %s37 = sphi 0, %s34
      %s38 = sphi 0, %s35
      %s39 = sphi 0, %s36
      %s40 = sphi 0, %s37
      %s52 = sphi 0, %s52
      %s54 = sphi 0, %s52
      %s55 = sphi 0, %s54
      %s69 = sphi 0, %s55
      %s77 = sphi 0, %s79
      %s80 = sphi 0, %s77
      %s81 = sphi 0, %s80
      %s97 = sphi 0, %s81
      %s103 = sphi 0, %s105
      %s106 = sphi 0, %s103
      %s107 = sphi 0, %s106
      %s123 = sphi 0, %s107
      %s129 = sphi 0, %s131
      %s132 = sphi 0, %s129
      %s133 = sphi 0, %s132
      %s149 = sphi 0, %s133
      %s155 = sphi 0, %s157
      %s158 = sphi 0, %s155
      %s159 = sphi 0, %s158
      %s175 = sphi 0, %s159
      %s181 = sphi 0, %s183
      %s184 = sphi 0, %s181
      %s185 = sphi 0, %s184
      %s201 = sphi 0, %s185
      %s209 = sphi 0, %s211
      %s212 = sphi 0, %s209
      %s213 = sphi 0, %s212
      %s229 = sphi 0, %s213
    $region4: #{tpu_custom_call.1} parent=1 // loop_header_branch
      %28 = sbr.rel (%p26) target = $region8
    $region5: #{tpu_custom_call.1} parent=1 // loop_body
      %s30 = ssub.s32 %s25, 1
      %s31 = ssub.s32 %s25, 2
      %s41 = sadd.s32 1, %s34
      %p42 = scmp.ge.s32.totalorder %s41, 3
      %s43 = scalar_select %p42, 0, %s41
      %s44 = sadd.s32 1, %s33
      %s45 = scalar_select %p42, %s44, %s33
      %p46 = scmp.ge.s32.totalorder %s45, 2
      %s47 = scalar_select %p46, 0, %s45
      %s48 = sadd.s32 1, %s32
      %s49 = scalar_select %p46, %s48, %s32
      %p50 = scmp.ge.s32.totalorder %s49, 2
      %s51 = scalar_select %p50, 0, %s49
      %s53 = sadd.s32 %s52, 1
      %p56 = scmp.eq.s32.totalorder %s25, 11
      %p57 = scmp.ne.s32.totalorder %s52, %s54
      %p58 = scmp.eq.s32.totalorder %s25, 0
      %p59 = por %p57, %p58
      %p60 = scmp.ne.s32.totalorder %s52, %s54
      %p61 = scmp.eq.s32.totalorder %s30, 11
      %p62 = por %p60, %p61
      %p63 = scmp.ne.s32.totalorder %s54, %s55
      %p64 = scmp.eq.s32.totalorder %s30, 0
      %p65 = por %p63, %p64
      %p66 = scmp.ne.s32.totalorder %s54, %s55
      %p67 = scmp.eq.s32.totalorder %s31, 11
      %p68 = por %p66, %p67
      %p70 = scmp.ne.s32.totalorder %s55, %s69
      %p71 = scmp.eq.s32.totalorder %s31, 0
      %p72 = por %p70, %p71
      %s73 = ssub.s32 %s34, %s43
      %s74 = ssub.s32 %s32, %s51
      %s75 = sor.u32 %s73, %s74
      %p76 = scmp.eq.s32.totalorder %s75, 0
      %s78 = sadd.s32 %s77, 1
      %s79 = scalar_select %p76, %s77, %s78
      %p82 = pneg %p76
      %p83 = scmp.eq.s32.totalorder %s25, 11
      %p84 = por %p82, %p83
      %p85 = scmp.ne.s32.totalorder %s77, %s80
      %p86 = scmp.eq.s32.totalorder %s25, 0
      %p87 = por %p85, %p86
      %p88 = scmp.ne.s32.totalorder %s77, %s80
      %p89 = scmp.eq.s32.totalorder %s30, 11
      %p90 = por %p88, %p89
      %p91 = scmp.ne.s32.totalorder %s80, %s81
      %p92 = scmp.eq.s32.totalorder %s30, 0
      %p93 = por %p91, %p92
      %p94 = scmp.ne.s32.totalorder %s80, %s81
      %p95 = scmp.eq.s32.totalorder %s31, 11
      %p96 = por %p94, %p95
      %p98 = scmp.ne.s32.totalorder %s81, %s97
      %p99 = scmp.eq.s32.totalorder %s31, 0
      %p100 = por %p98, %p99
      %s101 = ssub.s32 %s33, %s47
      %p102 = scmp.eq.s32.totalorder %s101, 0
      %s104 = sadd.s32 %s103, 1
      %s105 = scalar_select %p102, %s103, %s104
      %p108 = pneg %p102
      %p109 = scmp.eq.s32.totalorder %s25, 11
      %p110 = por %p108, %p109
      %p111 = scmp.ne.s32.totalorder %s103, %s106
      %p112 = scmp.eq.s32.totalorder %s25, 0
      %p113 = por %p111, %p112
      %p114 = scmp.ne.s32.totalorder %s103, %s106
      %p115 = scmp.eq.s32.totalorder %s30, 11
      %p116 = por %p114, %p115
      %p117 = scmp.ne.s32.totalorder %s106, %s107
      %p118 = scmp.eq.s32.totalorder %s30, 0
      %p119 = por %p117, %p118
      %p120 = scmp.ne.s32.totalorder %s106, %s107
      %p121 = scmp.eq.s32.totalorder %s31, 11
      %p122 = por %p120, %p121
      %p124 = scmp.ne.s32.totalorder %s107, %s123
      %p125 = scmp.eq.s32.totalorder %s31, 0
      %p126 = por %p124, %p125
      %s127 = ssub.s32 %s34, %s43
      %p128 = scmp.eq.s32.totalorder %s127, 0
      %s130 = sadd.s32 %s129, 1
      %s131 = scalar_select %p128, %s129, %s130
      %p134 = pneg %p128
      %p135 = scmp.eq.s32.totalorder %s25, 11
      %p136 = por %p134, %p135
      %p137 = scmp.ne.s32.totalorder %s129, %s132
      %p138 = scmp.eq.s32.totalorder %s25, 0
      %p139 = por %p137, %p138
      %p140 = scmp.ne.s32.totalorder %s129, %s132
      %p141 = scmp.eq.s32.totalorder %s30, 11
      %p142 = por %p140, %p141
      %p143 = scmp.ne.s32.totalorder %s132, %s133
      %p144 = scmp.eq.s32.totalorder %s30, 0
      %p145 = por %p143, %p144
      %p146 = scmp.ne.s32.totalorder %s132, %s133
      %p147 = scmp.eq.s32.totalorder %s31, 11
      %p148 = por %p146, %p147
      %p150 = scmp.ne.s32.totalorder %s133, %s149
      %p151 = scmp.eq.s32.totalorder %s31, 0
      %p152 = por %p150, %p151
      %s153 = ssub.s32 %s34, %s43
      %p154 = scmp.eq.s32.totalorder %s153, 0
      %s156 = sadd.s32 %s155, 1
      %s157 = scalar_select %p154, %s155, %s156
      %p160 = pneg %p154
      %p161 = scmp.eq.s32.totalorder %s25, 11
      %p162 = por %p160, %p161
      %p163 = scmp.ne.s32.totalorder %s155, %s158
      %p164 = scmp.eq.s32.totalorder %s25, 0
      %p165 = por %p163, %p164
      %p166 = scmp.ne.s32.totalorder %s155, %s158
      %p167 = scmp.eq.s32.totalorder %s30, 11
      %p168 = por %p166, %p167
      %p169 = scmp.ne.s32.totalorder %s158, %s159
      %p170 = scmp.eq.s32.totalorder %s30, 0
      %p171 = por %p169, %p170
      %p172 = scmp.ne.s32.totalorder %s158, %s159
      %p173 = scmp.eq.s32.totalorder %s31, 11
      %p174 = por %p172, %p173
      %p176 = scmp.ne.s32.totalorder %s159, %s175
      %p177 = scmp.eq.s32.totalorder %s31, 0
      %p178 = por %p176, %p177
      %s179 = ssub.s32 %s34, %s43
      %p180 = scmp.eq.s32.totalorder %s179, 0
      %s182 = sadd.s32 %s181, 1
      %s183 = scalar_select %p180, %s181, %s182
      %p186 = pneg %p180
      %p187 = scmp.eq.s32.totalorder %s25, 11
      %p188 = por %p186, %p187
      %p189 = scmp.ne.s32.totalorder %s181, %s184
      %p190 = scmp.eq.s32.totalorder %s25, 0
      %p191 = por %p189, %p190
      %p192 = scmp.ne.s32.totalorder %s181, %s184
      %p193 = scmp.eq.s32.totalorder %s30, 11
      %p194 = por %p192, %p193
      %p195 = scmp.ne.s32.totalorder %s184, %s185
      %p196 = scmp.eq.s32.totalorder %s30, 0
      %p197 = por %p195, %p196
      %p198 = scmp.ne.s32.totalorder %s184, %s185
      %p199 = scmp.eq.s32.totalorder %s31, 11
      %p200 = por %p198, %p199
      %p202 = scmp.ne.s32.totalorder %s185, %s201
      %p203 = scmp.eq.s32.totalorder %s31, 0
      %p204 = por %p202, %p203
      %s205 = ssub.s32 %s32, %s51
      %s206 = ssub.s32 %s33, %s47
      %s207 = sor.u32 %s205, %s206
      %p208 = scmp.eq.s32.totalorder %s207, 0
      %s210 = sadd.s32 %s209, 1
      %s211 = scalar_select %p208, %s209, %s210
      %p214 = pneg %p208
      %p215 = scmp.eq.s32.totalorder %s25, 11
      %p216 = por %p214, %p215
      %p217 = scmp.ne.s32.totalorder %s209, %s212
      %p218 = scmp.eq.s32.totalorder %s25, 0
      %p219 = por %p217, %p218
      %p220 = scmp.ne.s32.totalorder %s209, %s212
      %p221 = scmp.eq.s32.totalorder %s30, 11
      %p222 = por %p220, %p221
      %p223 = scmp.ne.s32.totalorder %s212, %s213
      %p224 = scmp.eq.s32.totalorder %s30, 0
      %p225 = por %p223, %p224
      %p226 = scmp.ne.s32.totalorder %s212, %s213
      %p227 = scmp.eq.s32.totalorder %s31, 11
      %p228 = por %p226, %p227
      %p230 = scmp.ne.s32.totalorder %s213, %s229
      %p231 = scmp.eq.s32.totalorder %s31, 0
      %p232 = por %p230, %p231
      %p233 = scmp.le.s32.totalorder 1, %s25
      %p234 = scmp.lt.s32.totalorder %s25, 13
      %p235 = pnand %p233, %p234
      %p236 = pneg %p235
      // Predicated region
      $region9: #{tpu_custom_call.1} parent=5 // pred_check
        _
      $region10: #{tpu_custom_call.1} parent=5 // pred_check_branch
        %238 = sbr.rel (%p235) target = $region12
      $region11: #{tpu_custom_call.1} parent=5 // pred_region
        %s239 = ssub.s32 %s25, 1
        // Predicated region
        $region13: #{tpu_custom_call.1} parent=11 // pred_check
          %p240 = pneg %p65
        $region14: #{tpu_custom_call.1} parent=11 // pred_check_branch
          %242 = sbr.rel (%p240) target = $region16
        $region15: #{tpu_custom_call.1} parent=11 // pred_region
          %s244 = ssub.s32 16, 16
          %245 = vsyncadd [#allocation6], %s244
          %248 = dma.hbm_to_smem %s0, 16, [#allocation3], [#allocation6]
        $region16: #{tpu_custom_call.1} parent=11 // pred_fallthru
          _
      $region12: #{tpu_custom_call.1} parent=5 // pred_fallthru
        _
      %p249 = scmp.lt.s32.totalorder %s25, 12
      // Predicated region
      $region17: #{tpu_custom_call.1} parent=5 // pred_check
        %p250 = pneg %p249
      $region18: #{tpu_custom_call.1} parent=5 // pred_check_branch
        %252 = sbr.rel (%p250) target = $region20
      $region19: #{tpu_custom_call.1} parent=5 // pred_region
        // Predicated region
        $region21: #{tpu_custom_call.1} parent=19 // pred_check
          %p253 = pneg %p87
        $region22: #{tpu_custom_call.1} parent=19 // pred_check_branch
          %255 = sbr.rel (%p253) target = $region24
        $region23: #{tpu_custom_call.1} parent=19 // pred_region
          %s256 = sand.u32 %s77, 1
          %s257 = scalar_lea.sflag [#allocation4], %s256
          %s258 = sand.u32 %s77, 1
          %s259 = smul.addr %s258, 256
          %s260 = scalar_lea.vmem [#allocation7], %s259
          %s262 = ssub.s32 4096, 4096
          %263 = vsyncadd %s257, %s262
          %s264 = smul.addr %s32, 32
          %s265 = smul.addr %s34, 64
          %s266 = sadd.s32 %s264, %s265
          %s267 = smul.addr %s266, 128
          %s268 = scalar_lea.hbm %s1, %s267
          %s269 = sshll.u32 %s260, 4
          %s270 = int_to_ptr.vmem [resolvable:$true] %s269
          %275 = dma.hbm_to_vmem [thread:$0]  %s268, 4096, %s270, %s257, 128, 128, 8
        $region24: #{tpu_custom_call.1} parent=19 // pred_fallthru
          _
        // Predicated region
        $region25: #{tpu_custom_call.1} parent=19 // pred_check
          %p276 = pneg %p113
        $region26: #{tpu_custom_call.1} parent=19 // pred_check_branch
          %278 = sbr.rel (%p276) target = $region28
        $region27: #{tpu_custom_call.1} parent=19 // pred_region
          %s279 = sand.u32 %s25, 1
          %s280 = scalar_lea.sflag [#allocation9], %s279
          %s281 = sand.u32 %s103, 1
          %s282 = smul.addr %s281, 256
          %s283 = scalar_lea.vmem [#allocation8], %s282
          %s284 = smul.u32 16, %s33
          %s286 = ssub.s32 4096, 4096
          %287 = vsyncadd %s280, %s286
          %s288 = smul.addr %s284, 2
          %s289 = smul.addr %s288, 128
          %s290 = scalar_lea.hbm %s2, %s289
          %s291 = sshll.u32 %s283, 4
          %s292 = int_to_ptr.vmem [resolvable:$true] %s291
          %297 = dma.hbm_to_vmem [thread:$0]  %s290, 4096, %s292, %s280, 256, 256, 16
        $region28: #{tpu_custom_call.1} parent=19 // pred_fallthru
          _
        // Predicated region
        $region29: #{tpu_custom_call.1} parent=19 // pred_check
          %p298 = pneg %p139
        $region30: #{tpu_custom_call.1} parent=19 // pred_check_branch
          %300 = sbr.rel (%p298) target = $region32
        $region31: #{tpu_custom_call.1} parent=19 // pred_region
          %s301 = sand.u32 %s25, 1
          %s302 = scalar_lea.sflag [#allocation9], %s301
          %s303 = sand.u32 %s129, 1
          %s304 = smul.addr %s303, 128
          %s305 = scalar_lea.vmem [#allocation10], %s304
          %s307 = ssub.s32 2048, 2048
          %308 = vsyncadd %s302, %s307
          %s309 = smul.addr %s34, 16
          %s310 = smul.addr %s309, 128
          %s311 = scalar_lea.hbm %s3, %s310
          %s312 = sshll.u32 %s305, 4
          %s313 = int_to_ptr.vmem [resolvable:$true] %s312
          %318 = dma.hbm_to_vmem [thread:$0]  %s311, 2048, %s313, %s302, 128, 128, 8
        $region32: #{tpu_custom_call.1} parent=19 // pred_fallthru
          _
        // Predicated region
        $region33: #{tpu_custom_call.1} parent=19 // pred_check
          %p319 = pneg %p165
        $region34: #{tpu_custom_call.1} parent=19 // pred_check_branch
          %321 = sbr.rel (%p319) target = $region36
        $region35: #{tpu_custom_call.1} parent=19 // pred_region
          %s322 = sand.u32 %s25, 1
          %s323 = scalar_lea.sflag [#allocation12], %s322
          %s324 = sand.u32 %s155, 1
          %s325 = smul.addr %s324, 128
          %s326 = scalar_lea.vmem [#allocation11], %s325
          %s328 = ssub.s32 2048, 2048
          %329 = vsyncadd %s323, %s328
          %s330 = smul.addr %s34, 16
          %s331 = smul.addr %s330, 128
          %s332 = scalar_lea.hbm %s4, %s331
          %s333 = sshll.u32 %s326, 4
          %s334 = int_to_ptr.vmem [resolvable:$true] %s333
          %339 = dma.hbm_to_vmem [thread:$0]  %s332, 2048, %s334, %s323, 128, 128, 8
        $region36: #{tpu_custom_call.1} parent=19 // pred_fallthru
          _
        // Predicated region
        $region37: #{tpu_custom_call.1} parent=19 // pred_check
          %p340 = pneg %p191
        $region38: #{tpu_custom_call.1} parent=19 // pred_check_branch
          %342 = sbr.rel (%p340) target = $region40
        $region39: #{tpu_custom_call.1} parent=19 // pred_region
          %s343 = sand.u32 %s25, 1
          %s344 = scalar_lea.sflag [#allocation12], %s343
          %s345 = sand.u32 %s181, 1
          %s346 = smul.addr %s345, 128
          %s347 = scalar_lea.vmem [#allocation13], %s346
          %s349 = ssub.s32 2048, 2048
          %350 = vsyncadd %s344, %s349
          %s351 = smul.addr %s34, 16
          %s352 = smul.addr %s351, 128
          %s353 = scalar_lea.hbm %s5, %s352
          %s354 = sshll.u32 %s347, 4
          %s355 = int_to_ptr.vmem [resolvable:$true] %s354
          %360 = dma.hbm_to_vmem [thread:$0]  %s353, 2048, %s355, %s344, 128, 128, 8
        $region40: #{tpu_custom_call.1} parent=19 // pred_fallthru
          _
      $region20: #{tpu_custom_call.1} parent=5 // pred_fallthru
        _
      %p361 = scmp.le.s32.totalorder 1, %s25
      %p362 = scmp.lt.s32.totalorder %s25, 13
      %p363 = pnand %p361, %p362
      %p364 = pneg %p363
      // Predicated region
      $region41: #{tpu_custom_call.1} parent=5 // pred_check
        _
      $region42: #{tpu_custom_call.1} parent=5 // pred_check_branch
        %366 = sbr.rel (%p363) target = $region44
      $region43: #{tpu_custom_call.1} parent=5 // pred_region
        %s367 = ssub.s32 %s25, 1
        // Predicated region
        $region45: #{tpu_custom_call.1} parent=43 // pred_check
          %p368 = pneg %p65
        $region46: #{tpu_custom_call.1} parent=43 // pred_check_branch
          %370 = sbr.rel (%p368) target = $region48
        $region47: #{tpu_custom_call.1} parent=43 // pred_region
          %371 = dma.done [#allocation6], 16
        $region48: #{tpu_custom_call.1} parent=43 // pred_fallthru
          _
        %s372 = sand.u32 %s80, 1
        %s373 = scalar_lea.sflag [#allocation4], %s372
        %s374 = sand.u32 %s80, 1
        %s375 = smul.addr %s374, 256
        %s376 = scalar_lea.vmem [#allocation7], %s375
        // Predicated region
        $region49: #{tpu_custom_call.1} parent=43 // pred_check
          %p377 = pneg %p93
        $region50: #{tpu_custom_call.1} parent=43 // pred_check_branch
          %379 = sbr.rel (%p377) target = $region52
        $region51: #{tpu_custom_call.1} parent=43 // pred_region
          %380 = dma.done %s373, 4096
        $region52: #{tpu_custom_call.1} parent=43 // pred_fallthru
          _
        %s381 = sand.u32 %s30, 1
        %s382 = scalar_lea.sflag [#allocation9], %s381
        %s383 = sand.u32 %s106, 1
        %s384 = smul.addr %s383, 256
        %s385 = scalar_lea.vmem [#allocation8], %s384
        // Predicated region
        $region53: #{tpu_custom_call.1} parent=43 // pred_check
          %p386 = pneg %p119
        $region54: #{tpu_custom_call.1} parent=43 // pred_check_branch
          %388 = sbr.rel (%p386) target = $region56
        $region55: #{tpu_custom_call.1} parent=43 // pred_region
          %389 = dma.done %s382, 4096
        $region56: #{tpu_custom_call.1} parent=43 // pred_fallthru
          _
        %s390 = sand.u32 %s30, 1
        %s391 = scalar_lea.sflag [#allocation9], %s390
        %s392 = sand.u32 %s132, 1
        %s393 = smul.addr %s392, 128
        %s394 = scalar_lea.vmem [#allocation10], %s393
        // Predicated region
        $region57: #{tpu_custom_call.1} parent=43 // pred_check
          %p395 = pneg %p145
        $region58: #{tpu_custom_call.1} parent=43 // pred_check_branch
          %397 = sbr.rel (%p395) target = $region60
        $region59: #{tpu_custom_call.1} parent=43 // pred_region
          %398 = dma.done %s391, 2048
        $region60: #{tpu_custom_call.1} parent=43 // pred_fallthru
          _
        %s399 = sand.u32 %s30, 1
        %s400 = scalar_lea.sflag [#allocation12], %s399
        %s401 = sand.u32 %s158, 1
        %s402 = smul.addr %s401, 128
        %s403 = scalar_lea.vmem [#allocation11], %s402
        // Predicated region
        $region61: #{tpu_custom_call.1} parent=43 // pred_check
          %p404 = pneg %p171
        $region62: #{tpu_custom_call.1} parent=43 // pred_check_branch
          %406 = sbr.rel (%p404) target = $region64
        $region63: #{tpu_custom_call.1} parent=43 // pred_region
          %407 = dma.done %s400, 2048
        $region64: #{tpu_custom_call.1} parent=43 // pred_fallthru
          _
        %s408 = sand.u32 %s30, 1
        %s409 = scalar_lea.sflag [#allocation12], %s408
        %s410 = sand.u32 %s184, 1
        %s411 = smul.addr %s410, 128
        %s412 = scalar_lea.vmem [#allocation13], %s411
        // Predicated region
        $region65: #{tpu_custom_call.1} parent=43 // pred_check
          %p413 = pneg %p197
        $region66: #{tpu_custom_call.1} parent=43 // pred_check_branch
          %415 = sbr.rel (%p413) target = $region68
        $region67: #{tpu_custom_call.1} parent=43 // pred_region
          %416 = dma.done %s409, 2048
        $region68: #{tpu_custom_call.1} parent=43 // pred_fallthru
          _
        %417 = sfence
        %p418 = pneg %p65
        %p419 = pneg %p62
        %s420 = sand.u32 %s80, 1
        %s421 = scalar_lea.sflag [#allocation4], %s420
        %s422 = sand.u32 %s80, 1
        %s423 = smul.addr %s422, 256
        %s424 = scalar_lea.vmem [#allocation7], %s423
        %p425 = pneg %p93
        %p426 = pneg %p90
        %s427 = sand.u32 %s30, 1
        %s428 = scalar_lea.sflag [#allocation9], %s427
        %s429 = sand.u32 %s106, 1
        %s430 = smul.addr %s429, 256
        %s431 = scalar_lea.vmem [#allocation8], %s430
        %p432 = pneg %p119
        %p433 = pneg %p116
        %s434 = sand.u32 %s30, 1
        %s435 = scalar_lea.sflag [#allocation9], %s434
        %s436 = sand.u32 %s132, 1
        %s437 = smul.addr %s436, 128
        %s438 = scalar_lea.vmem [#allocation10], %s437
        %p439 = pneg %p145
        %p440 = pneg %p142
        %s441 = sand.u32 %s30, 1
        %s442 = scalar_lea.sflag [#allocation12], %s441
        %s443 = sand.u32 %s158, 1
        %s444 = smul.addr %s443, 128
        %s445 = scalar_lea.vmem [#allocation11], %s444
        %p446 = pneg %p171
        %p447 = pneg %p168
        %s448 = sand.u32 %s30, 1
        %s449 = scalar_lea.sflag [#allocation12], %s448
        %s450 = sand.u32 %s184, 1
        %s451 = smul.addr %s450, 128
        %s452 = scalar_lea.vmem [#allocation13], %s451
        %p453 = pneg %p197
        %p454 = pneg %p194
        %p455 = pneg %p225
        %p456 = pneg %p222
        %s457 = sand.u32 %s212, 1
        %s458 = scalar_lea.sflag [#allocation5], %s457
        %s459 = sand.u32 %s212, 1
        %s460 = smul.addr %s459, 128
        %s461 = scalar_lea.vmem [#allocation14], %s460
        %s462 = smul.u32 16, %s36
        %s463 = smul.u32 16, %s36
        %p465 = scmp.eq.s32.totalorder %s37, 0
        // Predicated region
        $region69: #{tpu_custom_call.1} parent=43 // pred_check
          %p466 = pneg %p465
        $region70: #{tpu_custom_call.1} parent=43 // pred_check_branch
          %468 = sbr.rel (%p466) target = $region72
        $region71: #{tpu_custom_call.1} parent=43 // pred_region
          %469 = vst [vmem:[#allocation2] sm:$0xff] 0.0
          %470 = vst [vmem:[#allocation2 + $0x8] sm:$0xff] 0.0
          %471 = vst [vmem:[#allocation2 + $0x10] sm:$0xff] 0.0
          %472 = vst [vmem:[#allocation2 + $0x18] sm:$0xff] 0.0
          %473 = vst [vmem:[#allocation2 + $0x20] sm:$0xff] 0.0
          %474 = vst [vmem:[#allocation2 + $0x28] sm:$0xff] 0.0
          %475 = vst [vmem:[#allocation2 + $0x30] sm:$0xff] 0.0
          %476 = vst [vmem:[#allocation2 + $0x38] sm:$0xff] 0.0
          %477 = vst [vmem:[#allocation2 + $0x40] sm:$0xff] 0.0
          %478 = vst [vmem:[#allocation2 + $0x48] sm:$0xff] 0.0
          %479 = vst [vmem:[#allocation2 + $0x50] sm:$0xff] 0.0
          %480 = vst [vmem:[#allocation2 + $0x58] sm:$0xff] 0.0
          %481 = vst [vmem:[#allocation2 + $0x60] sm:$0xff] 0.0
          %482 = vst [vmem:[#allocation2 + $0x68] sm:$0xff] 0.0
          %483 = vst [vmem:[#allocation2 + $0x70] sm:$0xff] 0.0
          %484 = vst [vmem:[#allocation2 + $0x78] sm:$0xff] 0.0
        $region72: #{tpu_custom_call.1} parent=43 // pred_fallthru
          _
        %s485 = sld [smem:[#allocation3 + %s37]]
        %v486 = vld [vmem:[%s376] sm:$0xff]
        %v487 = vld [vmem:[%s376 + $0x8] sm:$0xff]
        %v488 = vld [vmem:[%s376 + $0x10] sm:$0xff]
        %v489 = vld [vmem:[%s376 + $0x18] sm:$0xff]
        %v490 = vld [vmem:[%s376 + $0x20] sm:$0xff]
        %v491 = vld [vmem:[%s376 + $0x28] sm:$0xff]
        %v492 = vld [vmem:[%s376 + $0x30] sm:$0xff]
        %v493 = vld [vmem:[%s376 + $0x38] sm:$0xff]
        %v494 = vld [vmem:[%s376 + $0x40] sm:$0xff]
        %v495 = vld [vmem:[%s376 + $0x48] sm:$0xff]
        %v496 = vld [vmem:[%s376 + $0x50] sm:$0xff]
        %v497 = vld [vmem:[%s376 + $0x58] sm:$0xff]
        %v498 = vld [vmem:[%s376 + $0x60] sm:$0xff]
        %v499 = vld [vmem:[%s376 + $0x68] sm:$0xff]
        %v500 = vld [vmem:[%s376 + $0x70] sm:$0xff]
        %v501 = vld [vmem:[%s376 + $0x78] sm:$0xff]
        %v502 = vld [vmem:[%s376 + $0x80] sm:$0xff]
        %v503 = vld [vmem:[%s376 + $0x88] sm:$0xff]
        %v504 = vld [vmem:[%s376 + $0x90] sm:$0xff]
        %v505 = vld [vmem:[%s376 + $0x98] sm:$0xff]
        %v506 = vld [vmem:[%s376 + $0xa0] sm:$0xff]
        %v507 = vld [vmem:[%s376 + $0xa8] sm:$0xff]
        %v508 = vld [vmem:[%s376 + $0xb0] sm:$0xff]
        %v509 = vld [vmem:[%s376 + $0xb8] sm:$0xff]
        %v510 = vld [vmem:[%s376 + $0xc0] sm:$0xff]
        %v511 = vld [vmem:[%s376 + $0xc8] sm:$0xff]
        %v512 = vld [vmem:[%s376 + $0xd0] sm:$0xff]
        %v513 = vld [vmem:[%s376 + $0xd8] sm:$0xff]
        %v514 = vld [vmem:[%s376 + $0xe0] sm:$0xff]
        %v515 = vld [vmem:[%s376 + $0xe8] sm:$0xff]
        %v516 = vld [vmem:[%s376 + $0xf0] sm:$0xff]
        %v517 = vld [vmem:[%s376 + $0xf8] sm:$0xff]
        %v518 = vpack.c.bf16 %v487, %v486
        %v519 = vpack.c.bf16 %v489, %v488
        %v520 = vpack.c.bf16 %v491, %v490
        %v521 = vpack.c.bf16 %v493, %v492
        %v522 = vpack.c.bf16 %v495, %v494
        %v523 = vpack.c.bf16 %v497, %v496
        %v524 = vpack.c.bf16 %v499, %v498
        %v525 = vpack.c.bf16 %v501, %v500
        %v526 = vpack.c.bf16 %v503, %v502
        %v527 = vpack.c.bf16 %v505, %v504
        %v528 = vpack.c.bf16 %v507, %v506
        %v529 = vpack.c.bf16 %v509, %v508
        %v530 = vpack.c.bf16 %v511, %v510
        %v531 = vpack.c.bf16 %v513, %v512
        %v532 = vpack.c.bf16 %v515, %v514
        %v533 = vpack.c.bf16 %v517, %v516
        %s534 = smul.u32 %s36, 128
        %s535 = scalar_lea.vmem %s376, %s534 [#allocation7]
        %v536 = vld [vmem:[%s535] sm:$0xff]
        %v537 = vld [vmem:[%s535 + $0x8] sm:$0xff]
        %v538 = vld [vmem:[%s535 + $0x10] sm:$0xff]
        %v539 = vld [vmem:[%s535 + $0x18] sm:$0xff]
        %v540 = vld [vmem:[%s535 + $0x20] sm:$0xff]
        %v541 = vld [vmem:[%s535 + $0x28] sm:$0xff]
        %v542 = vld [vmem:[%s535 + $0x30] sm:$0xff]
        %v543 = vld [vmem:[%s535 + $0x38] sm:$0xff]
        %v544 = vld [vmem:[%s535 + $0x40] sm:$0xff]
        %v545 = vld [vmem:[%s535 + $0x48] sm:$0xff]
        %v546 = vld [vmem:[%s535 + $0x50] sm:$0xff]
        %v547 = vld [vmem:[%s535 + $0x58] sm:$0xff]
        %v548 = vld [vmem:[%s535 + $0x60] sm:$0xff]
        %v549 = vld [vmem:[%s535 + $0x68] sm:$0xff]
        %v550 = vld [vmem:[%s535 + $0x70] sm:$0xff]
        %v551 = vld [vmem:[%s535 + $0x78] sm:$0xff]
        %v552 = vpack.c.bf16 %v537, %v536
        %v553 = vpack.c.bf16 %v539, %v538
        %v554 = vpack.c.bf16 %v541, %v540
        %v555 = vpack.c.bf16 %v543, %v542
        %v556 = vpack.c.bf16 %v545, %v544
        %v557 = vpack.c.bf16 %v547, %v546
        %v558 = vpack.c.bf16 %v549, %v548
        %v559 = vpack.c.bf16 %v551, %v550
        %v560 = vld [vmem:[%s394] sm:$0xff]
        %v561 = vld [vmem:[%s394 + $0x8] sm:$0xff]
        %v562 = vld [vmem:[%s394 + $0x10] sm:$0xff]
        %v563 = vld [vmem:[%s394 + $0x18] sm:$0xff]
        %v564 = vld [vmem:[%s394 + $0x20] sm:$0xff]
        %v565 = vld [vmem:[%s394 + $0x28] sm:$0xff]
        %v566 = vld [vmem:[%s394 + $0x30] sm:$0xff]
        %v567 = vld [vmem:[%s394 + $0x38] sm:$0xff]
        %v568 = vld [vmem:[%s394 + $0x40] sm:$0xff]
        %v569 = vld [vmem:[%s394 + $0x48] sm:$0xff]
        %v570 = vld [vmem:[%s394 + $0x50] sm:$0xff]
        %v571 = vld [vmem:[%s394 + $0x58] sm:$0xff]
        %v572 = vld [vmem:[%s394 + $0x60] sm:$0xff]
        %v573 = vld [vmem:[%s394 + $0x68] sm:$0xff]
        %v574 = vld [vmem:[%s394 + $0x70] sm:$0xff]
        %v575 = vld [vmem:[%s394 + $0x78] sm:$0xff]
        %v576 = vpack.c.bf16 %v561, %v560
        %v577 = vpack.c.bf16 %v563, %v562
        %v578 = vpack.c.bf16 %v565, %v564
        %v579 = vpack.c.bf16 %v567, %v566
        %v580 = vpack.c.bf16 %v569, %v568
        %v581 = vpack.c.bf16 %v571, %v570
        %v582 = vpack.c.bf16 %v573, %v572
        %v583 = vpack.c.bf16 %v575, %v574
        %v584 = vld [vmem:[%s403] sm:$0xff]
        %v585 = vld [vmem:[%s403 + $0x8] sm:$0xff]
        %v586 = vld [vmem:[%s403 + $0x10] sm:$0xff]
        %v587 = vld [vmem:[%s403 + $0x18] sm:$0xff]
        %v588 = vld [vmem:[%s403 + $0x20] sm:$0xff]
        %v589 = vld [vmem:[%s403 + $0x28] sm:$0xff]
        %v590 = vld [vmem:[%s403 + $0x30] sm:$0xff]
        %v591 = vld [vmem:[%s403 + $0x38] sm:$0xff]
        %v592 = vld [vmem:[%s403 + $0x40] sm:$0xff]
        %v593 = vld [vmem:[%s403 + $0x48] sm:$0xff]
        %v594 = vld [vmem:[%s403 + $0x50] sm:$0xff]
        %v595 = vld [vmem:[%s403 + $0x58] sm:$0xff]
        %v596 = vld [vmem:[%s403 + $0x60] sm:$0xff]
        %v597 = vld [vmem:[%s403 + $0x68] sm:$0xff]
        %v598 = vld [vmem:[%s403 + $0x70] sm:$0xff]
        %v599 = vld [vmem:[%s403 + $0x78] sm:$0xff]
        %v600 = vpack.c.bf16 %v585, %v584
        %v601 = vpack.c.bf16 %v587, %v586
        %v602 = vpack.c.bf16 %v589, %v588
        %v603 = vpack.c.bf16 %v591, %v590
        %v604 = vpack.c.bf16 %v593, %v592
        %v605 = vpack.c.bf16 %v595, %v594
        %v606 = vpack.c.bf16 %v597, %v596
        %v607 = vpack.c.bf16 %v599, %v598
        %v608 = vld [vmem:[%s412] sm:$0xff]
        %v609 = vld [vmem:[%s412 + $0x8] sm:$0xff]
        %v610 = vld [vmem:[%s412 + $0x10] sm:$0xff]
        %v611 = vld [vmem:[%s412 + $0x18] sm:$0xff]
        %v612 = vld [vmem:[%s412 + $0x20] sm:$0xff]
        %v613 = vld [vmem:[%s412 + $0x28] sm:$0xff]
        %v614 = vld [vmem:[%s412 + $0x30] sm:$0xff]
        %v615 = vld [vmem:[%s412 + $0x38] sm:$0xff]
        %v616 = vld [vmem:[%s412 + $0x40] sm:$0xff]
        %v617 = vld [vmem:[%s412 + $0x48] sm:$0xff]
        %v618 = vld [vmem:[%s412 + $0x50] sm:$0xff]
        %v619 = vld [vmem:[%s412 + $0x58] sm:$0xff]
        %v620 = vld [vmem:[%s412 + $0x60] sm:$0xff]
        %v621 = vld [vmem:[%s412 + $0x68] sm:$0xff]
        %v622 = vld [vmem:[%s412 + $0x70] sm:$0xff]
        %v623 = vld [vmem:[%s412 + $0x78] sm:$0xff]
        %v624 = vpack.c.bf16 %v609, %v608
        %v625 = vpack.c.bf16 %v611, %v610
        %v626 = vpack.c.bf16 %v613, %v612
        %v627 = vpack.c.bf16 %v615, %v614
        %v628 = vpack.c.bf16 %v617, %v616
        %v629 = vpack.c.bf16 %v619, %v618
        %v630 = vpack.c.bf16 %v621, %v620
        %v631 = vpack.c.bf16 %v623, %v622
        %632 = vmatprep.subr.bf16.mxu0 0
        %633 = vmatpush1.bf16.msra.mxu0 %v576
        %634 = vmatprep.subr.bf16.mxu0 0
        %635 = vmatpush1.bf16.msra.mxu0 %v577
        %636 = vmatprep.subr.bf16.mxu0 0
        %637 = vmatpush1.bf16.msra.mxu0 %v578
        %638 = vmatprep.subr.bf16.mxu0 0
        %639 = vmatpush1.bf16.msra.mxu0 %v579
        %640 = vmatprep.subr.bf16.mxu0 0
        %641 = vmatpush1.bf16.msra.mxu0 %v580
        %642 = vmatprep.subr.bf16.mxu0 0
        %643 = vmatpush1.bf16.msra.mxu0 %v581
        %644 = vmatprep.subr.bf16.mxu0 0
        %645 = vmatpush1.bf16.msra.mxu0 %v582
        %646 = vmatprep.subr.bf16.mxu0 0
        %647 = vmatpush1.bf16.msra.mxu0 %v583
        %648 = vmatprep.subr.bf16.mxu0 0
        %649 = vmatpush1.bf16.msra.mxu0 0
        %650 = vmatprep.subr.bf16.mxu0 0
        %651 = vmatpush1.bf16.msra.mxu0 0
        %652 = vmatprep.subr.bf16.mxu0 0
        %653 = vmatpush1.bf16.msra.mxu0 0
        %654 = vmatprep.subr.bf16.mxu0 0
        %655 = vmatpush1.bf16.msra.mxu0 0
        %656 = vmatprep.subr.bf16.mxu0 0
        %657 = vmatpush1.bf16.msra.mxu0 0
        %658 = vmatprep.subr.bf16.mxu0 0
        %659 = vmatpush1.bf16.msra.mxu0 0
        %660 = vmatprep.subr.bf16.mxu0 0
        %661 = vmatpush1.bf16.msra.mxu0 0
        %662 = vmatprep.subr.bf16.mxu0 0
        %663 = vmatpush1.bf16.msra.mxu0 0
        %664 = vmatprep.mubr.bf16.mxu0 0
        %665 = vmatmul.mubr.bf16.gmra.mrb[0].mxu0 %v552
        %v666 = vpop.f32.mrb[0].mxu0
        %v667 = vadd.f32 0.0, %v666
        %v668 = vpop.f32.mrb[0].mxu0
        %v669 = vpop.f32.mrb[0].mxu0
        %v670 = vadd.f32 0.0, %v669
        %v671 = vpop.f32.mrb[0].mxu0
        %672 = vmatprep.mubr.bf16.mxu0 0
        %673 = vmatmul.mubr.bf16.gmra.mrb[0].mxu0 %v553
        %v674 = vpop.f32.mrb[0].mxu0
        %v675 = vadd.f32 0.0, %v674
        %v676 = vpop.f32.mrb[0].mxu0
        %v677 = vpop.f32.mrb[0].mxu0
        %v678 = vadd.f32 0.0, %v677
        %v679 = vpop.f32.mrb[0].mxu0
        %680 = vmatprep.mubr.bf16.mxu0 0
        %681 = vmatmul.mubr.bf16.gmra.mrb[0].mxu0 %v554
        %v682 = vpop.f32.mrb[0].mxu0
        %v683 = vadd.f32 0.0, %v682
        %v684 = vpop.f32.mrb[0].mxu0
        %v685 = vpop.f32.mrb[0].mxu0
        %v686 = vadd.f32 0.0, %v685
        %v687 = vpop.f32.mrb[0].mxu0
        %688 = vmatprep.mubr.bf16.mxu0 0
        %689 = vmatmul.mubr.bf16.gmra.mrb[0].mxu0 %v555
        %v690 = vpop.f32.mrb[0].mxu0
        %v691 = vadd.f32 0.0, %v690
        %v692 = vpop.f32.mrb[0].mxu0
        %v693 = vpop.f32.mrb[0].mxu0
        %v694 = vadd.f32 0.0, %v693
        %v695 = vpop.f32.mrb[0].mxu0
        %696 = vmatprep.mubr.bf16.mxu0 0
        %697 = vmatmul.mubr.bf16.gmra.mrb[0].mxu0 %v556
        %v698 = vpop.f32.mrb[0].mxu0
        %v699 = vadd.f32 0.0, %v698
        %v700 = vpop.f32.mrb[0].mxu0
        %v701 = vpop.f32.mrb[0].mxu0
        %v702 = vadd.f32 0.0, %v701
        %v703 = vpop.f32.mrb[0].mxu0
        %704 = vmatprep.mubr.bf16.mxu0 0
        %705 = vmatmul.mubr.bf16.gmra.mrb[0].mxu0 %v557
        %v706 = vpop.f32.mrb[0].mxu0
        %v707 = vadd.f32 0.0, %v706
        %v708 = vpop.f32.mrb[0].mxu0
        %v709 = vpop.f32.mrb[0].mxu0
        %v710 = vadd.f32 0.0, %v709
        %v711 = vpop.f32.mrb[0].mxu0
        %712 = vmatprep.mubr.bf16.mxu0 0
        %713 = vmatmul.mubr.bf16.gmra.mrb[0].mxu0 %v558
        %v714 = vpop.f32.mrb[0].mxu0
        %v715 = vadd.f32 0.0, %v714
        %v716 = vpop.f32.mrb[0].mxu0
        %v717 = vpop.f32.mrb[0].mxu0
        %v718 = vadd.f32 0.0, %v717
        %v719 = vpop.f32.mrb[0].mxu0
        %720 = vmatprep.mubr.bf16.mxu0 0
        %721 = vmatmul.mubr.bf16.gmra.mrb[0].mxu0 %v559
        %v722 = vpop.f32.mrb[0].mxu0
        %v723 = vadd.f32 0.0, %v722
        %v724 = vpop.f32.mrb[0].mxu0
        %v725 = vpop.f32.mrb[0].mxu0
        %v726 = vadd.f32 0.0, %v725
        %v727 = vpop.f32.mrb[0].mxu0
        %728 = vdwg.mxu0
        %729 = vmatprep.subr.bf16.mxu0 0
        %730 = vmatpush1.bf16.msra.mxu0 %v600
        %731 = vmatprep.subr.bf16.mxu0 0
        %732 = vmatpush1.bf16.msra.mxu0 %v601
        %733 = vmatprep.subr.bf16.mxu0 0
        %734 = vmatpush1.bf16.msra.mxu0 %v602
        %735 = vmatprep.subr.bf16.mxu0 0
        %736 = vmatpush1.bf16.msra.mxu0 %v603
        %737 = vmatprep.subr.bf16.mxu0 0
        %738 = vmatpush1.bf16.msra.mxu0 %v604
        %739 = vmatprep.subr.bf16.mxu0 0
        %740 = vmatpush1.bf16.msra.mxu0 %v605
        %741 = vmatprep.subr.bf16.mxu0 0
        %742 = vmatpush1.bf16.msra.mxu0 %v606
        %743 = vmatprep.subr.bf16.mxu0 0
        %744 = vmatpush1.bf16.msra.mxu0 %v607
        %745 = vmatprep.subr.bf16.mxu0 0
        %746 = vmatpush1.bf16.msra.mxu0 0
        %747 = vmatprep.subr.bf16.mxu0 0
        %748 = vmatpush1.bf16.msra.mxu0 0
        %749 = vmatprep.subr.bf16.mxu0 0
        %750 = vmatpush1.bf16.msra.mxu0 0
        %751 = vmatprep.subr.bf16.mxu0 0
        %752 = vmatpush1.bf16.msra.mxu0 0
        %753 = vmatprep.subr.bf16.mxu0 0
        %754 = vmatpush1.bf16.msra.mxu0 0
        %755 = vmatprep.subr.bf16.mxu0 0
        %756 = vmatpush1.bf16.msra.mxu0 0
        %757 = vmatprep.subr.bf16.mxu0 0
        %758 = vmatpush1.bf16.msra.mxu0 0
        %759 = vmatprep.subr.bf16.mxu0 0
        %760 = vmatpush1.bf16.msra.mxu0 0
        %761 = vmatprep.mubr.bf16.mxu0 0
        %762 = vmatmul.mubr.bf16.gmra.mrb[0].mxu0 %v518
        %v763 = vpop.f32.mrb[0].mxu0
        %v764 = vadd.f32 0.0, %v763
        %v765 = vpop.f32.mrb[0].mxu0
        %v766 = vpop.f32.mrb[0].mxu0
        %v767 = vadd.f32 0.0, %v766
        %v768 = vpop.f32.mrb[0].mxu0
        %769 = vmatprep.mubr.bf16.mxu0 0
        %770 = vmatmul.mubr.bf16.gmra.mrb[0].mxu0 %v519
        %v771 = vpop.f32.mrb[0].mxu0
        %v772 = vadd.f32 0.0, %v771
        %v773 = vpop.f32.mrb[0].mxu0
        %v774 = vpop.f32.mrb[0].mxu0
        %v775 = vadd.f32 0.0, %v774
        %v776 = vpop.f32.mrb[0].mxu0
        %777 = vmatprep.mubr.bf16.mxu0 0
        %778 = vmatmul.mubr.bf16.gmra.mrb[0].mxu0 %v520
        %v779 = vpop.f32.mrb[0].mxu0
        %v780 = vadd.f32 0.0, %v779
        %v781 = vpop.f32.mrb[0].mxu0
        %v782 = vpop.f32.mrb[0].mxu0
        %v783 = vadd.f32 0.0, %v782
        %v784 = vpop.f32.mrb[0].mxu0
        %785 = vmatprep.mubr.bf16.mxu0 0
        %786 = vmatmul.mubr.bf16.gmra.mrb[0].mxu0 %v521
        %v787 = vpop.f32.mrb[0].mxu0
        %v788 = vadd.f32 0.0, %v787
        %v789 = vpop.f32.mrb[0].mxu0
        %v790 = vpop.f32.mrb[0].mxu0
        %v791 = vadd.f32 0.0, %v790
        %v792 = vpop.f32.mrb[0].mxu0
        %793 = vmatprep.mubr.bf16.mxu0 0
        %794 = vmatmul.mubr.bf16.gmra.mrb[0].mxu0 %v522
        %v795 = vpop.f32.mrb[0].mxu0
        %v796 = vadd.f32 0.0, %v795
        %v797 = vpop.f32.mrb[0].mxu0
        %v798 = vpop.f32.mrb[0].mxu0
        %v799 = vadd.f32 0.0, %v798
        %v800 = vpop.f32.mrb[0].mxu0
        %801 = vmatprep.mubr.bf16.mxu0 0
        %802 = vmatmul.mubr.bf16.gmra.mrb[0].mxu0 %v523
        %v803 = vpop.f32.mrb[0].mxu0
        %v804 = vadd.f32 0.0, %v803
        %v805 = vpop.f32.mrb[0].mxu0
        %v806 = vpop.f32.mrb[0].mxu0
        %v807 = vadd.f32 0.0, %v806
        %v808 = vpop.f32.mrb[0].mxu0
        %809 = vmatprep.mubr.bf16.mxu0 0
        %810 = vmatmul.mubr.bf16.gmra.mrb[0].mxu0 %v524
        %v811 = vpop.f32.mrb[0].mxu0
        %v812 = vadd.f32 0.0, %v811
        %v813 = vpop.f32.mrb[0].mxu0
        %v814 = vpop.f32.mrb[0].mxu0
        %v815 = vadd.f32 0.0, %v814
        %v816 = vpop.f32.mrb[0].mxu0
        %817 = vmatprep.mubr.bf16.mxu0 0
        %818 = vmatmul.mubr.bf16.gmra.mrb[0].mxu0 %v525
        %v819 = vpop.f32.mrb[0].mxu0
        %v820 = vadd.f32 0.0, %v819
        %v821 = vpop.f32.mrb[0].mxu0
        %v822 = vpop.f32.mrb[0].mxu0
        %v823 = vadd.f32 0.0, %v822
        %v824 = vpop.f32.mrb[0].mxu0
        %825 = vmatprep.mubr.bf16.mxu0 0
        %826 = vmatmul.mubr.bf16.gmra.mrb[0].mxu0 %v526
        %v827 = vpop.f32.mrb[0].mxu0
        %v828 = vadd.f32 0.0, %v827
        %v829 = vpop.f32.mrb[0].mxu0
        %v830 = vpop.f32.mrb[0].mxu0
        %v831 = vadd.f32 0.0, %v830
        %v832 = vpop.f32.mrb[0].mxu0
        %833 = vmatprep.mubr.bf16.mxu0 0
        %834 = vmatmul.mubr.bf16.gmra.mrb[0].mxu0 %v527
        %v835 = vpop.f32.mrb[0].mxu0
        %v836 = vadd.f32 0.0, %v835
        %v837 = vpop.f32.mrb[0].mxu0
        %v838 = vpop.f32.mrb[0].mxu0
        %v839 = vadd.f32 0.0, %v838
        %v840 = vpop.f32.mrb[0].mxu0
        %841 = vmatprep.mubr.bf16.mxu0 0
        %842 = vmatmul.mubr.bf16.gmra.mrb[0].mxu0 %v528
        %v843 = vpop.f32.mrb[0].mxu0
        %v844 = vadd.f32 0.0, %v843
        %v845 = vpop.f32.mrb[0].mxu0
        %v846 = vpop.f32.mrb[0].mxu0
        %v847 = vadd.f32 0.0, %v846
        %v848 = vpop.f32.mrb[0].mxu0
        %849 = vmatprep.mubr.bf16.mxu0 0
        %850 = vmatmul.mubr.bf16.gmra.mrb[0].mxu0 %v529
        %v851 = vpop.f32.mrb[0].mxu0
        %v852 = vadd.f32 0.0, %v851
        %v853 = vpop.f32.mrb[0].mxu0
        %v854 = vpop.f32.mrb[0].mxu0
        %v855 = vadd.f32 0.0, %v854
        %v856 = vpop.f32.mrb[0].mxu0
        %857 = vmatprep.mubr.bf16.mxu0 0
        %858 = vmatmul.mubr.bf16.gmra.mrb[0].mxu0 %v530
        %v859 = vpop.f32.mrb[0].mxu0
        %v860 = vadd.f32 0.0, %v859
        %v861 = vpop.f32.mrb[0].mxu0
        %v862 = vpop.f32.mrb[0].mxu0
        %v863 = vadd.f32 0.0, %v862
        %v864 = vpop.f32.mrb[0].mxu0
        %865 = vmatprep.mubr.bf16.mxu0 0
        %866 = vmatmul.mubr.bf16.gmra.mrb[0].mxu0 %v531
        %v867 = vpop.f32.mrb[0].mxu0
        %v868 = vadd.f32 0.0, %v867
        %v869 = vpop.f32.mrb[0].mxu0
        %v870 = vpop.f32.mrb[0].mxu0
        %v871 = vadd.f32 0.0, %v870
        %v872 = vpop.f32.mrb[0].mxu0
        %873 = vmatprep.mubr.bf16.mxu0 0
        %874 = vmatmul.mubr.bf16.gmra.mrb[0].mxu0 %v532
        %v875 = vpop.f32.mrb[0].mxu0
        %v876 = vadd.f32 0.0, %v875
        %v877 = vpop.f32.mrb[0].mxu0
        %v878 = vpop.f32.mrb[0].mxu0
        %v879 = vadd.f32 0.0, %v878
        %v880 = vpop.f32.mrb[0].mxu0
        %881 = vmatprep.mubr.bf16.mxu0 0
        %882 = vmatmul.mubr.bf16.gmra.mrb[0].mxu0 %v533
        %v883 = vpop.f32.mrb[0].mxu0
        %v884 = vadd.f32 0.0, %v883
        %v885 = vpop.f32.mrb[0].mxu0
        %v886 = vpop.f32.mrb[0].mxu0
        %v887 = vadd.f32 0.0, %v886
        %v888 = vpop.f32.mrb[0].mxu0
        %889 = vdwg.mxu0
        %890 = vmatprep.subr.bf16.mxu0 0
        %891 = vmatpush1.bf16.msra.mxu0 %v624
        %892 = vmatprep.subr.bf16.mxu0 0
        %893 = vmatpush1.bf16.msra.mxu0 %v625
        %894 = vmatprep.subr.bf16.mxu0 0
        %895 = vmatpush1.bf16.msra.mxu0 %v626
        %896 = vmatprep.subr.bf16.mxu0 0
        %897 = vmatpush1.bf16.msra.mxu0 %v627
        %898 = vmatprep.subr.bf16.mxu0 0
        %899 = vmatpush1.bf16.msra.mxu0 %v628
        %900 = vmatprep.subr.bf16.mxu0 0
        %901 = vmatpush1.bf16.msra.mxu0 %v629
        %902 = vmatprep.subr.bf16.mxu0 0
        %903 = vmatpush1.bf16.msra.mxu0 %v630
        %904 = vmatprep.subr.bf16.mxu0 0
        %905 = vmatpush1.bf16.msra.mxu0 %v631
        %906 = vmatprep.subr.bf16.mxu0 0
        %907 = vmatpush1.bf16.msra.mxu0 0
        %908 = vmatprep.subr.bf16.mxu0 0
        %909 = vmatpush1.bf16.msra.mxu0 0
        %910 = vmatprep.subr.bf16.mxu0 0
        %911 = vmatpush1.bf16.msra.mxu0 0
        %912 = vmatprep.subr.bf16.mxu0 0
        %913 = vmatpush1.bf16.msra.mxu0 0
        %914 = vmatprep.subr.bf16.mxu0 0
        %915 = vmatpush1.bf16.msra.mxu0 0
        %916 = vmatprep.subr.bf16.mxu0 0
        %917 = vmatpush1.bf16.msra.mxu0 0
        %918 = vmatprep.subr.bf16.mxu0 0
        %919 = vmatpush1.bf16.msra.mxu0 0
        %920 = vmatprep.subr.bf16.mxu0 0
        %921 = vmatpush1.bf16.msra.mxu0 0
        %922 = vmatprep.mubr.bf16.mxu0 0
        %923 = vmatmul.mubr.bf16.gmra.mrb[0].mxu0 %v518
        %v924 = vpop.f32.mrb[0].mxu0
        %v925 = vadd.f32 0.0, %v924
        %v926 = vpop.f32.mrb[0].mxu0
        %v927 = vpop.f32.mrb[0].mxu0
        %v928 = vadd.f32 0.0, %v927
        %v929 = vpop.f32.mrb[0].mxu0
        %930 = vmatprep.mubr.bf16.mxu0 0
        %931 = vmatmul.mubr.bf16.gmra.mrb[0].mxu0 %v519
        %v932 = vpop.f32.mrb[0].mxu0
        %v933 = vadd.f32 0.0, %v932
        %v934 = vpop.f32.mrb[0].mxu0
        %v935 = vpop.f32.mrb[0].mxu0
        %v936 = vadd.f32 0.0, %v935
        %v937 = vpop.f32.mrb[0].mxu0
        %938 = vmatprep.mubr.bf16.mxu0 0
        %939 = vmatmul.mubr.bf16.gmra.mrb[0].mxu0 %v520
        %v940 = vpop.f32.mrb[0].mxu0
        %v941 = vadd.f32 0.0, %v940
        %v942 = vpop.f32.mrb[0].mxu0
        %v943 = vpop.f32.mrb[0].mxu0
        %v944 = vadd.f32 0.0, %v943
        %v945 = vpop.f32.mrb[0].mxu0
        %946 = vmatprep.mubr.bf16.mxu0 0
        %947 = vmatmul.mubr.bf16.gmra.mrb[0].mxu0 %v521
        %v948 = vpop.f32.mrb[0].mxu0
        %v949 = vadd.f32 0.0, %v948
        %v950 = vpop.f32.mrb[0].mxu0
        %v951 = vpop.f32.mrb[0].mxu0
        %v952 = vadd.f32 0.0, %v951
        %v953 = vpop.f32.mrb[0].mxu0
        %954 = vmatprep.mubr.bf16.mxu0 0
        %955 = vmatmul.mubr.bf16.gmra.mrb[0].mxu0 %v522
        %v956 = vpop.f32.mrb[0].mxu0
        %v957 = vadd.f32 0.0, %v956
        %v958 = vpop.f32.mrb[0].mxu0
        %v959 = vpop.f32.mrb[0].mxu0
        %v960 = vadd.f32 0.0, %v959
        %v961 = vpop.f32.mrb[0].mxu0
        %962 = vmatprep.mubr.bf16.mxu0 0
        %963 = vmatmul.mubr.bf16.gmra.mrb[0].mxu0 %v523
        %v964 = vpop.f32.mrb[0].mxu0
        %v965 = vadd.f32 0.0, %v964
        %v966 = vpop.f32.mrb[0].mxu0
        %v967 = vpop.f32.mrb[0].mxu0
        %v968 = vadd.f32 0.0, %v967
        %v969 = vpop.f32.mrb[0].mxu0
        %970 = vmatprep.mubr.bf16.mxu0 0
        %971 = vmatmul.mubr.bf16.gmra.mrb[0].mxu0 %v524
        %v972 = vpop.f32.mrb[0].mxu0
        %v973 = vadd.f32 0.0, %v972
        %v974 = vpop.f32.mrb[0].mxu0
        %v975 = vpop.f32.mrb[0].mxu0
        %v976 = vadd.f32 0.0, %v975
        %v977 = vpop.f32.mrb[0].mxu0
        %978 = vmatprep.mubr.bf16.mxu0 0
        %979 = vmatmul.mubr.bf16.gmra.mrb[0].mxu0 %v525
        %v980 = vpop.f32.mrb[0].mxu0
        %v981 = vadd.f32 0.0, %v980
        %v982 = vpop.f32.mrb[0].mxu0
        %v983 = vpop.f32.mrb[0].mxu0
        %v984 = vadd.f32 0.0, %v983
        %v985 = vpop.f32.mrb[0].mxu0
        %986 = vmatprep.mubr.bf16.mxu0 0
        %987 = vmatmul.mubr.bf16.gmra.mrb[0].mxu0 %v526
        %v988 = vpop.f32.mrb[0].mxu0
        %v989 = vadd.f32 0.0, %v988
        %v990 = vpop.f32.mrb[0].mxu0
        %v991 = vpop.f32.mrb[0].mxu0
        %v992 = vadd.f32 0.0, %v991
        %v993 = vpop.f32.mrb[0].mxu0
        %994 = vmatprep.mubr.bf16.mxu0 0
        %995 = vmatmul.mubr.bf16.gmra.mrb[0].mxu0 %v527
        %v996 = vpop.f32.mrb[0].mxu0
        %v997 = vadd.f32 0.0, %v996
        %v998 = vpop.f32.mrb[0].mxu0
        %v999 = vpop.f32.mrb[0].mxu0
        %v1000 = vadd.f32 0.0, %v999
        %v1001 = vpop.f32.mrb[0].mxu0
        %1002 = vmatprep.mubr.bf16.mxu0 0
        %1003 = vmatmul.mubr.bf16.gmra.mrb[0].mxu0 %v528
        %v1004 = vpop.f32.mrb[0].mxu0
        %v1005 = vadd.f32 0.0, %v1004
        %v1006 = vpop.f32.mrb[0].mxu0
        %v1007 = vpop.f32.mrb[0].mxu0
        %v1008 = vadd.f32 0.0, %v1007
        %v1009 = vpop.f32.mrb[0].mxu0
        %1010 = vmatprep.mubr.bf16.mxu0 0
        %1011 = vmatmul.mubr.bf16.gmra.mrb[0].mxu0 %v529
        %v1012 = vpop.f32.mrb[0].mxu0
        %v1013 = vadd.f32 0.0, %v1012
        %v1014 = vpop.f32.mrb[0].mxu0
        %v1015 = vpop.f32.mrb[0].mxu0
        %v1016 = vadd.f32 0.0, %v1015
        %v1017 = vpop.f32.mrb[0].mxu0
        %1018 = vmatprep.mubr.bf16.mxu0 0
        %1019 = vmatmul.mubr.bf16.gmra.mrb[0].mxu0 %v530
        %v1020 = vpop.f32.mrb[0].mxu0
        %v1021 = vadd.f32 0.0, %v1020
        %v1022 = vpop.f32.mrb[0].mxu0
        %v1023 = vpop.f32.mrb[0].mxu0
        %v1024 = vadd.f32 0.0, %v1023
        %v1025 = vpop.f32.mrb[0].mxu0
        %1026 = vmatprep.mubr.bf16.mxu0 0
        %1027 = vmatmul.mubr.bf16.gmra.mrb[0].mxu0 %v531
        %v1028 = vpop.f32.mrb[0].mxu0
        %v1029 = vadd.f32 0.0, %v1028
        %v1030 = vpop.f32.mrb[0].mxu0
        %v1031 = vpop.f32.mrb[0].mxu0
        %v1032 = vadd.f32 0.0, %v1031
        %v1033 = vpop.f32.mrb[0].mxu0
        %1034 = vmatprep.mubr.bf16.mxu0 0
        %1035 = vmatmul.mubr.bf16.gmra.mrb[0].mxu0 %v532
        %v1036 = vpop.f32.mrb[0].mxu0
        %v1037 = vadd.f32 0.0, %v1036
        %v1038 = vpop.f32.mrb[0].mxu0
        %v1039 = vpop.f32.mrb[0].mxu0
        %v1040 = vadd.f32 0.0, %v1039
        %v1041 = vpop.f32.mrb[0].mxu0
        %1042 = vmatprep.mubr.bf16.mxu0 0
        %1043 = vmatmul.mubr.bf16.gmra.mrb[0].mxu0 %v533
        %v1044 = vpop.f32.mrb[0].mxu0
        %v1045 = vadd.f32 0.0, %v1044
        %v1046 = vpop.f32.mrb[0].mxu0
        %v1047 = vpop.f32.mrb[0].mxu0
        %v1048 = vadd.f32 0.0, %v1047
        %v1049 = vpop.f32.mrb[0].mxu0
        %1050 = vdwg.mxu0
        %v1051 = vpack.c.bf16 %v670, %v667
        %v1052 = vpack.c.bf16 %v678, %v675
        %v1053 = vpack.c.bf16 %v686, %v683
        %v1054 = vpack.c.bf16 %v694, %v691
        %v1055 = vpack.c.bf16 %v702, %v699
        %v1056 = vpack.c.bf16 %v710, %v707
        %v1057 = vpack.c.bf16 %v718, %v715
        %v1058 = vpack.c.bf16 %v726, %v723
        %v1059 = vpack.c.bf16 %v767, %v764
        %v1060 = vpack.c.bf16 %v775, %v772
        %v1061 = vpack.c.bf16 %v783, %v780
        %v1062 = vpack.c.bf16 %v791, %v788
        %v1063 = vpack.c.bf16 %v799, %v796
        %v1064 = vpack.c.bf16 %v807, %v804
        %v1065 = vpack.c.bf16 %v815, %v812
        %v1066 = vpack.c.bf16 %v823, %v820
        %v1067 = vpack.c.bf16 %v831, %v828
        %v1068 = vpack.c.bf16 %v839, %v836
        %v1069 = vpack.c.bf16 %v847, %v844
        %v1070 = vpack.c.bf16 %v855, %v852
        %v1071 = vpack.c.bf16 %v863, %v860
        %v1072 = vpack.c.bf16 %v871, %v868
        %v1073 = vpack.c.bf16 %v879, %v876
        %v1074 = vpack.c.bf16 %v887, %v884
        %1075 = vmatprep.subr.bf16.mxu0 0
        %1076 = vmatpush1.bf16.xpose.msra.mxu0 %v1059
        %1077 = vmatprep.subr.bf16.mxu0 0
        %1078 = vmatpush1.bf16.xpose.msra.mxu0 %v1060
        %1079 = vmatprep.subr.bf16.mxu0 0
        %1080 = vmatpush1.bf16.xpose.msra.mxu0 %v1061
        %1081 = vmatprep.subr.bf16.mxu0 0
        %1082 = vmatpush1.bf16.xpose.msra.mxu0 %v1062
        %1083 = vmatprep.subr.bf16.mxu0 0
        %1084 = vmatpush1.bf16.xpose.msra.mxu0 %v1063
        %1085 = vmatprep.subr.bf16.mxu0 0
        %1086 = vmatpush1.bf16.xpose.msra.mxu0 %v1064
        %1087 = vmatprep.subr.bf16.mxu0 0
        %1088 = vmatpush1.bf16.xpose.msra.mxu0 %v1065
        %1089 = vmatprep.subr.bf16.mxu0 0
        %1090 = vmatpush1.bf16.xpose.msra.mxu0 %v1066
        %1091 = vmatprep.subr.bf16.mxu0 0
        %1092 = vmatpush1.bf16.xpose.msra.mxu0 %v1067
        %1093 = vmatprep.subr.bf16.mxu0 0
        %1094 = vmatpush1.bf16.xpose.msra.mxu0 %v1068
        %1095 = vmatprep.subr.bf16.mxu0 0
        %1096 = vmatpush1.bf16.xpose.msra.mxu0 %v1069
        %1097 = vmatprep.subr.bf16.mxu0 0
        %1098 = vmatpush1.bf16.xpose.msra.mxu0 %v1070
        %1099 = vmatprep.subr.bf16.mxu0 0
        %1100 = vmatpush1.bf16.xpose.msra.mxu0 %v1071
        %1101 = vmatprep.subr.bf16.mxu0 0
        %1102 = vmatpush1.bf16.xpose.msra.mxu0 %v1072
        %1103 = vmatprep.subr.bf16.mxu0 0
        %1104 = vmatpush1.bf16.xpose.msra.mxu0 %v1073
        %1105 = vmatprep.subr.bf16.mxu0 0
        %1106 = vmatpush1.bf16.xpose.msra.mxu0 %v1074
        %1107 = vmatprep.mubr.bf16.mxu0 0
        %1108 = vmatmul.mubr.bf16.gmra.mrb[0].mxu0 %v1051
        %v1109 = vpop.f32.mrb[0].mxu0
        %v1110 = vadd.f32 0.0, %v1109
        %v1111 = vpop.f32.mrb[0].mxu0
        %v1112 = vadd.f32 0.0, %v1111
        %v1113 = vpop.f32.mrb[0].mxu0
        %v1114 = vadd.f32 0.0, %v1113
        %v1115 = vpop.f32.mrb[0].mxu0
        %v1116 = vadd.f32 0.0, %v1115
        %1117 = vmatprep.mubr.bf16.mxu0 0
        %1118 = vmatmul.mubr.bf16.gmra.mrb[0].mxu0 %v1052
        %v1119 = vpop.f32.mrb[0].mxu0
        %v1120 = vadd.f32 0.0, %v1119
        %v1121 = vpop.f32.mrb[0].mxu0
        %v1122 = vadd.f32 0.0, %v1121
        %v1123 = vpop.f32.mrb[0].mxu0
        %v1124 = vadd.f32 0.0, %v1123
        %v1125 = vpop.f32.mrb[0].mxu0
        %v1126 = vadd.f32 0.0, %v1125
        %1127 = vmatprep.mubr.bf16.mxu0 0
        %1128 = vmatmul.mubr.bf16.gmra.mrb[0].mxu0 %v1053
        %v1129 = vpop.f32.mrb[0].mxu0
        %v1130 = vadd.f32 0.0, %v1129
        %v1131 = vpop.f32.mrb[0].mxu0
        %v1132 = vadd.f32 0.0, %v1131
        %v1133 = vpop.f32.mrb[0].mxu0
        %v1134 = vadd.f32 0.0, %v1133
        %v1135 = vpop.f32.mrb[0].mxu0
        %v1136 = vadd.f32 0.0, %v1135
        %1137 = vmatprep.mubr.bf16.mxu0 0
        %1138 = vmatmul.mubr.bf16.gmra.mrb[0].mxu0 %v1054
        %v1139 = vpop.f32.mrb[0].mxu0
        %v1140 = vadd.f32 0.0, %v1139
        %v1141 = vpop.f32.mrb[0].mxu0
        %v1142 = vadd.f32 0.0, %v1141
        %v1143 = vpop.f32.mrb[0].mxu0
        %v1144 = vadd.f32 0.0, %v1143
        %v1145 = vpop.f32.mrb[0].mxu0
        %v1146 = vadd.f32 0.0, %v1145
        %1147 = vmatprep.mubr.bf16.mxu0 0
        %1148 = vmatmul.mubr.bf16.gmra.mrb[0].mxu0 %v1055
        %v1149 = vpop.f32.mrb[0].mxu0
        %v1150 = vadd.f32 0.0, %v1149
        %v1151 = vpop.f32.mrb[0].mxu0
        %v1152 = vadd.f32 0.0, %v1151
        %v1153 = vpop.f32.mrb[0].mxu0
        %v1154 = vadd.f32 0.0, %v1153
        %v1155 = vpop.f32.mrb[0].mxu0
        %v1156 = vadd.f32 0.0, %v1155
        %1157 = vmatprep.mubr.bf16.mxu0 0
        %1158 = vmatmul.mubr.bf16.gmra.mrb[0].mxu0 %v1056
        %v1159 = vpop.f32.mrb[0].mxu0
        %v1160 = vadd.f32 0.0, %v1159
        %v1161 = vpop.f32.mrb[0].mxu0
        %v1162 = vadd.f32 0.0, %v1161
        %v1163 = vpop.f32.mrb[0].mxu0
        %v1164 = vadd.f32 0.0, %v1163
        %v1165 = vpop.f32.mrb[0].mxu0
        %v1166 = vadd.f32 0.0, %v1165
        %1167 = vmatprep.mubr.bf16.mxu0 0
        %1168 = vmatmul.mubr.bf16.gmra.mrb[0].mxu0 %v1057
        %v1169 = vpop.f32.mrb[0].mxu0
        %v1170 = vadd.f32 0.0, %v1169
        %v1171 = vpop.f32.mrb[0].mxu0
        %v1172 = vadd.f32 0.0, %v1171
        %v1173 = vpop.f32.mrb[0].mxu0
        %v1174 = vadd.f32 0.0, %v1173
        %v1175 = vpop.f32.mrb[0].mxu0
        %v1176 = vadd.f32 0.0, %v1175
        %1177 = vmatprep.mubr.bf16.mxu0 0
        %1178 = vmatmul.mubr.bf16.gmra.mrb[0].mxu0 %v1058
        %v1179 = vpop.f32.mrb[0].mxu0
        %v1180 = vadd.f32 0.0, %v1179
        %v1181 = vpop.f32.mrb[0].mxu0
        %v1182 = vadd.f32 0.0, %v1181
        %v1183 = vpop.f32.mrb[0].mxu0
        %v1184 = vadd.f32 0.0, %v1183
        %v1185 = vpop.f32.mrb[0].mxu0
        %v1186 = vadd.f32 0.0, %v1185
        %1187 = vdwg.mxu0
        %v1188 = vmul.f32 %v1110, 0.088388346
        %v1189 = vmul.f32 %v1112, 0.088388346
        %v1190 = vmul.f32 %v1114, 0.088388346
        %v1191 = vmul.f32 %v1116, 0.088388346
        %v1192 = vmul.f32 %v1120, 0.088388346
        %v1193 = vmul.f32 %v1122, 0.088388346
        %v1194 = vmul.f32 %v1124, 0.088388346
        %v1195 = vmul.f32 %v1126, 0.088388346
        %v1196 = vmul.f32 %v1130, 0.088388346
        %v1197 = vmul.f32 %v1132, 0.088388346
        %v1198 = vmul.f32 %v1134, 0.088388346
        %v1199 = vmul.f32 %v1136, 0.088388346
        %v1200 = vmul.f32 %v1140, 0.088388346
        %v1201 = vmul.f32 %v1142, 0.088388346
        %v1202 = vmul.f32 %v1144, 0.088388346
        %v1203 = vmul.f32 %v1146, 0.088388346
        %v1204 = vmul.f32 %v1150, 0.088388346
        %v1205 = vmul.f32 %v1152, 0.088388346
        %v1206 = vmul.f32 %v1154, 0.088388346
        %v1207 = vmul.f32 %v1156, 0.088388346
        %v1208 = vmul.f32 %v1160, 0.088388346
        %v1209 = vmul.f32 %v1162, 0.088388346
        %v1210 = vmul.f32 %v1164, 0.088388346
        %v1211 = vmul.f32 %v1166, 0.088388346
        %v1212 = vmul.f32 %v1170, 0.088388346
        %v1213 = vmul.f32 %v1172, 0.088388346
        %v1214 = vmul.f32 %v1174, 0.088388346
        %v1215 = vmul.f32 %v1176, 0.088388346
        %v1216 = vmul.f32 %v1180, 0.088388346
        %v1217 = vmul.f32 %v1182, 0.088388346
        %v1218 = vmul.f32 %v1184, 0.088388346
        %v1219 = vmul.f32 %v1186, 0.088388346
        %v1220 = vld [vmem:[%s385] sm:$0xff]
        %v1221 = vld [vmem:[%s385 + $0x8] sm:$0xff]
        %v1222 = vld [vmem:[%s385 + $0x10] sm:$0xff]
        %v1223 = vld [vmem:[%s385 + $0x18] sm:$0xff]
        %v1224 = vld [vmem:[%s385 + $0x20] sm:$0xff]
        %v1225 = vld [vmem:[%s385 + $0x28] sm:$0xff]
        %v1226 = vld [vmem:[%s385 + $0x30] sm:$0xff]
        %v1227 = vld [vmem:[%s385 + $0x38] sm:$0xff]
        %v1228 = vld [vmem:[%s385 + $0x40] sm:$0xff]
        %v1229 = vld [vmem:[%s385 + $0x48] sm:$0xff]
        %v1230 = vld [vmem:[%s385 + $0x50] sm:$0xff]
        %v1231 = vld [vmem:[%s385 + $0x58] sm:$0xff]
        %v1232 = vld [vmem:[%s385 + $0x60] sm:$0xff]
        %v1233 = vld [vmem:[%s385 + $0x68] sm:$0xff]
        %v1234 = vld [vmem:[%s385 + $0x70] sm:$0xff]
        %v1235 = vld [vmem:[%s385 + $0x78] sm:$0xff]
        %v1236 = vld [vmem:[%s385 + $0x80] sm:$0xff]
        %v1237 = vld [vmem:[%s385 + $0x88] sm:$0xff]
        %v1238 = vld [vmem:[%s385 + $0x90] sm:$0xff]
        %v1239 = vld [vmem:[%s385 + $0x98] sm:$0xff]
        %v1240 = vld [vmem:[%s385 + $0xa0] sm:$0xff]
        %v1241 = vld [vmem:[%s385 + $0xa8] sm:$0xff]
        %v1242 = vld [vmem:[%s385 + $0xb0] sm:$0xff]
        %v1243 = vld [vmem:[%s385 + $0xb8] sm:$0xff]
        %v1244 = vld [vmem:[%s385 + $0xc0] sm:$0xff]
        %v1245 = vld [vmem:[%s385 + $0xc8] sm:$0xff]
        %v1246 = vld [vmem:[%s385 + $0xd0] sm:$0xff]
        %v1247 = vld [vmem:[%s385 + $0xd8] sm:$0xff]
        %v1248 = vld [vmem:[%s385 + $0xe0] sm:$0xff]
        %v1249 = vld [vmem:[%s385 + $0xe8] sm:$0xff]
        %v1250 = vld [vmem:[%s385 + $0xf0] sm:$0xff]
        %v1251 = vld [vmem:[%s385 + $0xf8] sm:$0xff]
        %v1252 = vadd.f32 %v1188, %v1220
        %v1253 = vadd.f32 %v1189, %v1221
        %v1254 = vadd.f32 %v1190, %v1222
        %v1255 = vadd.f32 %v1191, %v1223
        %v1256 = vadd.f32 %v1192, %v1224
        %v1257 = vadd.f32 %v1193, %v1225
        %v1258 = vadd.f32 %v1194, %v1226
        %v1259 = vadd.f32 %v1195, %v1227
        %v1260 = vadd.f32 %v1196, %v1228
        %v1261 = vadd.f32 %v1197, %v1229
        %v1262 = vadd.f32 %v1198, %v1230
        %v1263 = vadd.f32 %v1199, %v1231
        %v1264 = vadd.f32 %v1200, %v1232
        %v1265 = vadd.f32 %v1201, %v1233
        %v1266 = vadd.f32 %v1202, %v1234
        %v1267 = vadd.f32 %v1203, %v1235
        %v1268 = vadd.f32 %v1204, %v1236
        %v1269 = vadd.f32 %v1205, %v1237
        %v1270 = vadd.f32 %v1206, %v1238
        %v1271 = vadd.f32 %v1207, %v1239
        %v1272 = vadd.f32 %v1208, %v1240
        %v1273 = vadd.f32 %v1209, %v1241
        %v1274 = vadd.f32 %v1210, %v1242
        %v1275 = vadd.f32 %v1211, %v1243
        %v1276 = vadd.f32 %v1212, %v1244
        %v1277 = vadd.f32 %v1213, %v1245
        %v1278 = vadd.f32 %v1214, %v1246
        %v1279 = vadd.f32 %v1215, %v1247
        %v1280 = vadd.f32 %v1216, %v1248
        %v1281 = vadd.f32 %v1217, %v1249
        %v1282 = vadd.f32 %v1218, %v1250
        %v1283 = vadd.f32 %v1219, %v1251
        %v1284 = vmax.f32 %v1252, %v1253
        %1285 = vmax.xlane.f32.xlu0 %v1284
        %v1286 = vpop.xlane.xlu0 %1285
        %v1287 = vmax.f32 %v1254, %v1255
        %1288 = vmax.xlane.f32.xlu0 %v1287
        %v1289 = vpop.xlane.xlu0 %1288
        %v1290 = vmax.f32 %v1256, %v1257
        %1291 = vmax.xlane.f32.xlu0 %v1290
        %v1292 = vpop.xlane.xlu0 %1291
        %v1293 = vmax.f32 %v1258, %v1259
        %1294 = vmax.xlane.f32.xlu0 %v1293
        %v1295 = vpop.xlane.xlu0 %1294
        %v1296 = vmax.f32 %v1260, %v1261
        %1297 = vmax.xlane.f32.xlu0 %v1296
        %v1298 = vpop.xlane.xlu0 %1297
        %v1299 = vmax.f32 %v1262, %v1263
        %1300 = vmax.xlane.f32.xlu0 %v1299
        %v1301 = vpop.xlane.xlu0 %1300
        %v1302 = vmax.f32 %v1264, %v1265
        %1303 = vmax.xlane.f32.xlu0 %v1302
        %v1304 = vpop.xlane.xlu0 %1303
        %v1305 = vmax.f32 %v1266, %v1267
        %1306 = vmax.xlane.f32.xlu0 %v1305
        %v1307 = vpop.xlane.xlu0 %1306
        %v1308 = vmax.f32 %v1268, %v1269
        %1309 = vmax.xlane.f32.xlu0 %v1308
        %v1310 = vpop.xlane.xlu0 %1309
        %v1311 = vmax.f32 %v1270, %v1271
        %1312 = vmax.xlane.f32.xlu0 %v1311
        %v1313 = vpop.xlane.xlu0 %1312
        %v1314 = vmax.f32 %v1272, %v1273
        %1315 = vmax.xlane.f32.xlu0 %v1314
        %v1316 = vpop.xlane.xlu0 %1315
        %v1317 = vmax.f32 %v1274, %v1275
        %1318 = vmax.xlane.f32.xlu0 %v1317
        %v1319 = vpop.xlane.xlu0 %1318
        %v1320 = vmax.f32 %v1276, %v1277
        %1321 = vmax.xlane.f32.xlu0 %v1320
        %v1322 = vpop.xlane.xlu0 %1321
        %v1323 = vmax.f32 %v1278, %v1279
        %1324 = vmax.xlane.f32.xlu0 %v1323
        %v1325 = vpop.xlane.xlu0 %1324
        %v1326 = vmax.f32 %v1280, %v1281
        %1327 = vmax.xlane.f32.xlu0 %v1326
        %v1328 = vpop.xlane.xlu0 %1327
        %v1329 = vmax.f32 %v1282, %v1283
        %1330 = vmax.xlane.f32.xlu0 %v1329
        %v1331 = vpop.xlane.xlu0 %1330
        %v1332 = vsub.f32 %v1252, %v1286
        %v1333 = vsub.f32 %v1253, %v1286
        %v1334 = vsub.f32 %v1254, %v1289
        %v1335 = vsub.f32 %v1255, %v1289
        %v1336 = vsub.f32 %v1256, %v1292
        %v1337 = vsub.f32 %v1257, %v1292
        %v1338 = vsub.f32 %v1258, %v1295
        %v1339 = vsub.f32 %v1259, %v1295
        %v1340 = vsub.f32 %v1260, %v1298
        %v1341 = vsub.f32 %v1261, %v1298
        %v1342 = vsub.f32 %v1262, %v1301
        %v1343 = vsub.f32 %v1263, %v1301
        %v1344 = vsub.f32 %v1264, %v1304
        %v1345 = vsub.f32 %v1265, %v1304
        %v1346 = vsub.f32 %v1266, %v1307
        %v1347 = vsub.f32 %v1267, %v1307
        %v1348 = vsub.f32 %v1268, %v1310
        %v1349 = vsub.f32 %v1269, %v1310
        %v1350 = vsub.f32 %v1270, %v1313
        %v1351 = vsub.f32 %v1271, %v1313
        %v1352 = vsub.f32 %v1272, %v1316
        %v1353 = vsub.f32 %v1273, %v1316
        %v1354 = vsub.f32 %v1274, %v1319
        %v1355 = vsub.f32 %v1275, %v1319
        %v1356 = vsub.f32 %v1276, %v1322
        %v1357 = vsub.f32 %v1277, %v1322
        %v1358 = vsub.f32 %v1278, %v1325
        %v1359 = vsub.f32 %v1279, %v1325
        %v1360 = vsub.f32 %v1280, %v1328
        %v1361 = vsub.f32 %v1281, %v1328
        %v1362 = vsub.f32 %v1282, %v1331
        %v1363 = vsub.f32 %v1283, %v1331
        %v1364 = vmul.f32 %v1332, 1.442695
        %v1365 = vpow.pop %v1364
        %v1366 = vmul.f32 %v1333, 1.442695
        %v1367 = vpow.pop %v1366
        %v1368 = vmul.f32 %v1334, 1.442695
        %v1369 = vpow.pop %v1368
        %v1370 = vmul.f32 %v1335, 1.442695
        %v1371 = vpow.pop %v1370
        %v1372 = vmul.f32 %v1336, 1.442695
        %v1373 = vpow.pop %v1372
        %v1374 = vmul.f32 %v1337, 1.442695
        %v1375 = vpow.pop %v1374
        %v1376 = vmul.f32 %v1338, 1.442695
        %v1377 = vpow.pop %v1376
        %v1378 = vmul.f32 %v1339, 1.442695
        %v1379 = vpow.pop %v1378
        %v1380 = vmul.f32 %v1340, 1.442695
        %v1381 = vpow.pop %v1380
        %v1382 = vmul.f32 %v1341, 1.442695
        %v1383 = vpow.pop %v1382
        %v1384 = vmul.f32 %v1342, 1.442695
        %v1385 = vpow.pop %v1384
        %v1386 = vmul.f32 %v1343, 1.442695
        %v1387 = vpow.pop %v1386
        %v1388 = vmul.f32 %v1344, 1.442695
        %v1389 = vpow.pop %v1388
        %v1390 = vmul.f32 %v1345, 1.442695
        %v1391 = vpow.pop %v1390
        %v1392 = vmul.f32 %v1346, 1.442695
        %v1393 = vpow.pop %v1392
        %v1394 = vmul.f32 %v1347, 1.442695
        %v1395 = vpow.pop %v1394
        %v1396 = vmul.f32 %v1348, 1.442695
        %v1397 = vpow.pop %v1396
        %v1398 = vmul.f32 %v1349, 1.442695
        %v1399 = vpow.pop %v1398
        %v1400 = vmul.f32 %v1350, 1.442695
        %v1401 = vpow.pop %v1400
        %v1402 = vmul.f32 %v1351, 1.442695
        %v1403 = vpow.pop %v1402
        %v1404 = vmul.f32 %v1352, 1.442695
        %v1405 = vpow.pop %v1404
        %v1406 = vmul.f32 %v1353, 1.442695
        %v1407 = vpow.pop %v1406
        %v1408 = vmul.f32 %v1354, 1.442695
        %v1409 = vpow.pop %v1408
        %v1410 = vmul.f32 %v1355, 1.442695
        %v1411 = vpow.pop %v1410
        %v1412 = vmul.f32 %v1356, 1.442695
        %v1413 = vpow.pop %v1412
        %v1414 = vmul.f32 %v1357, 1.442695
        %v1415 = vpow.pop %v1414
        %v1416 = vmul.f32 %v1358, 1.442695
        %v1417 = vpow.pop %v1416
        %v1418 = vmul.f32 %v1359, 1.442695
        %v1419 = vpow.pop %v1418
        %v1420 = vmul.f32 %v1360, 1.442695
        %v1421 = vpow.pop %v1420
        %v1422 = vmul.f32 %v1361, 1.442695
        %v1423 = vpow.pop %v1422
        %v1424 = vmul.f32 %v1362, 1.442695
        %v1425 = vpow.pop %v1424
        %v1426 = vmul.f32 %v1363, 1.442695
        %v1427 = vpow.pop %v1426
        %v1428 = vadd.f32 %v1365, %v1367
        %1429 = vadd.xlane.f32.xlu0 %v1428
        %v1430 = vpop.xlane.xlu0 %1429
        %v1431 = vadd.f32 %v1369, %v1371
        %1432 = vadd.xlane.f32.xlu0 %v1431
        %v1433 = vpop.xlane.xlu0 %1432
        %v1434 = vadd.f32 %v1373, %v1375
        %1435 = vadd.xlane.f32.xlu0 %v1434
        %v1436 = vpop.xlane.xlu0 %1435
        %v1437 = vadd.f32 %v1377, %v1379
        %1438 = vadd.xlane.f32.xlu0 %v1437
        %v1439 = vpop.xlane.xlu0 %1438
        %v1440 = vadd.f32 %v1381, %v1383
        %1441 = vadd.xlane.f32.xlu0 %v1440
        %v1442 = vpop.xlane.xlu0 %1441
        %v1443 = vadd.f32 %v1385, %v1387
        %1444 = vadd.xlane.f32.xlu0 %v1443
        %v1445 = vpop.xlane.xlu0 %1444
        %v1446 = vadd.f32 %v1389, %v1391
        %1447 = vadd.xlane.f32.xlu0 %v1446
        %v1448 = vpop.xlane.xlu0 %1447
        %v1449 = vadd.f32 %v1393, %v1395
        %1450 = vadd.xlane.f32.xlu0 %v1449
        %v1451 = vpop.xlane.xlu0 %1450
        %v1452 = vadd.f32 %v1397, %v1399
        %1453 = vadd.xlane.f32.xlu0 %v1452
        %v1454 = vpop.xlane.xlu0 %1453
        %v1455 = vadd.f32 %v1401, %v1403
        %1456 = vadd.xlane.f32.xlu0 %v1455
        %v1457 = vpop.xlane.xlu0 %1456
        %v1458 = vadd.f32 %v1405, %v1407
        %1459 = vadd.xlane.f32.xlu0 %v1458
        %v1460 = vpop.xlane.xlu0 %1459
        %v1461 = vadd.f32 %v1409, %v1411
        %1462 = vadd.xlane.f32.xlu0 %v1461
        %v1463 = vpop.xlane.xlu0 %1462
        %v1464 = vadd.f32 %v1413, %v1415
        %1465 = vadd.xlane.f32.xlu0 %v1464
        %v1466 = vpop.xlane.xlu0 %1465
        %v1467 = vadd.f32 %v1417, %v1419
        %1468 = vadd.xlane.f32.xlu0 %v1467
        %v1469 = vpop.xlane.xlu0 %1468
        %v1470 = vadd.f32 %v1421, %v1423
        %1471 = vadd.xlane.f32.xlu0 %v1470
        %v1472 = vpop.xlane.xlu0 %1471
        %v1473 = vadd.f32 %v1425, %v1427
        %1474 = vadd.xlane.f32.xlu0 %v1473
        %v1475 = vpop.xlane.xlu0 %1474
        %v1476 = vrcp.pop %v1430
        %v1477 = vrcp.pop %v1433
        %v1478 = vrcp.pop %v1436
        %v1479 = vrcp.pop %v1439
        %v1480 = vrcp.pop %v1442
        %v1481 = vrcp.pop %v1445
        %v1482 = vrcp.pop %v1448
        %v1483 = vrcp.pop %v1451
        %v1484 = vrcp.pop %v1454
        %v1485 = vrcp.pop %v1457
        %v1486 = vrcp.pop %v1460
        %v1487 = vrcp.pop %v1463
        %v1488 = vrcp.pop %v1466
        %v1489 = vrcp.pop %v1469
        %v1490 = vrcp.pop %v1472
        %v1491 = vrcp.pop %v1475
        %v1492 = vpack.c.bf16 %v1369, %v1365
        %v1493 = vpack.c.bf16 %v1371, %v1367
        %v1494 = vpack.c.bf16 %v1377, %v1373
        %v1495 = vpack.c.bf16 %v1379, %v1375
        %v1496 = vpack.c.bf16 %v1385, %v1381
        %v1497 = vpack.c.bf16 %v1387, %v1383
        %v1498 = vpack.c.bf16 %v1393, %v1389
        %v1499 = vpack.c.bf16 %v1395, %v1391
        %v1500 = vpack.c.bf16 %v1401, %v1397
        %v1501 = vpack.c.bf16 %v1403, %v1399
        %v1502 = vpack.c.bf16 %v1409, %v1405
        %v1503 = vpack.c.bf16 %v1411, %v1407
        %v1504 = vpack.c.bf16 %v1417, %v1413
        %v1505 = vpack.c.bf16 %v1419, %v1415
        %v1506 = vpack.c.bf16 %v1425, %v1421
        %v1507 = vpack.c.bf16 %v1427, %v1423
        %v1508 = vpack.c.bf16 %v928, %v925
        %v1509 = vpack.c.bf16 %v936, %v933
        %v1510 = vpack.c.bf16 %v944, %v941
        %v1511 = vpack.c.bf16 %v952, %v949
        %v1512 = vpack.c.bf16 %v960, %v957
        %v1513 = vpack.c.bf16 %v968, %v965
        %v1514 = vpack.c.bf16 %v976, %v973
        %v1515 = vpack.c.bf16 %v984, %v981
        %v1516 = vpack.c.bf16 %v992, %v989
        %v1517 = vpack.c.bf16 %v1000, %v997
        %v1518 = vpack.c.bf16 %v1008, %v1005
        %v1519 = vpack.c.bf16 %v1016, %v1013
        %v1520 = vpack.c.bf16 %v1024, %v1021
        %v1521 = vpack.c.bf16 %v1032, %v1029
        %v1522 = vpack.c.bf16 %v1040, %v1037
        %v1523 = vpack.c.bf16 %v1048, %v1045
        %1524 = vmatprep.subr.bf16.mxu0 0
        %1525 = vmatpush1.bf16.msra.mxu0 %v1508
        %1526 = vmatprep.subr.bf16.mxu0 0
        %1527 = vmatpush1.bf16.msra.mxu0 %v1509
        %1528 = vmatprep.subr.bf16.mxu0 0
        %1529 = vmatpush1.bf16.msra.mxu0 %v1510
        %1530 = vmatprep.subr.bf16.mxu0 0
        %1531 = vmatpush1.bf16.msra.mxu0 %v1511
        %1532 = vmatprep.subr.bf16.mxu0 0
        %1533 = vmatpush1.bf16.msra.mxu0 %v1512
        %1534 = vmatprep.subr.bf16.mxu0 0
        %1535 = vmatpush1.bf16.msra.mxu0 %v1513
        %1536 = vmatprep.subr.bf16.mxu0 0
        %1537 = vmatpush1.bf16.msra.mxu0 %v1514
        %1538 = vmatprep.subr.bf16.mxu0 0
        %1539 = vmatpush1.bf16.msra.mxu0 %v1515
        %1540 = vmatprep.subr.bf16.mxu0 0
        %1541 = vmatpush1.bf16.msra.mxu0 %v1516
        %1542 = vmatprep.subr.bf16.mxu0 0
        %1543 = vmatpush1.bf16.msra.mxu0 %v1517
        %1544 = vmatprep.subr.bf16.mxu0 0
        %1545 = vmatpush1.bf16.msra.mxu0 %v1518
        %1546 = vmatprep.subr.bf16.mxu0 0
        %1547 = vmatpush1.bf16.msra.mxu0 %v1519
        %1548 = vmatprep.subr.bf16.mxu0 0
        %1549 = vmatpush1.bf16.msra.mxu0 %v1520
        %1550 = vmatprep.subr.bf16.mxu0 0
        %1551 = vmatpush1.bf16.msra.mxu0 %v1521
        %1552 = vmatprep.subr.bf16.mxu0 0
        %1553 = vmatpush1.bf16.msra.mxu0 %v1522
        %1554 = vmatprep.subr.bf16.mxu0 0
        %1555 = vmatpush1.bf16.msra.mxu0 %v1523
        %1556 = vmatprep.mubr.bf16.mxu0 %v1493
        %1557 = vmatmul.mubr.bf16.gmra.mrb[0].mxu0 %v1492
        %v1558 = vpop.f32.mrb[0].mxu0
        %v1559 = vadd.f32 0.0, %v1558
        %v1560 = vpop.f32.mrb[0].mxu0
        %v1561 = vpop.f32.mrb[0].mxu0
        %v1562 = vadd.f32 0.0, %v1561
        %v1563 = vpop.f32.mrb[0].mxu0
        %1564 = vmatprep.mubr.bf16.mxu0 %v1495
        %1565 = vmatmul.mubr.bf16.gmra.mrb[0].mxu0 %v1494
        %v1566 = vpop.f32.mrb[0].mxu0
        %v1567 = vadd.f32 0.0, %v1566
        %v1568 = vpop.f32.mrb[0].mxu0
        %v1569 = vpop.f32.mrb[0].mxu0
        %v1570 = vadd.f32 0.0, %v1569
        %v1571 = vpop.f32.mrb[0].mxu0
        %1572 = vmatprep.mubr.bf16.mxu0 %v1497
        %1573 = vmatmul.mubr.bf16.gmra.mrb[0].mxu0 %v1496
        %v1574 = vpop.f32.mrb[0].mxu0
        %v1575 = vadd.f32 0.0, %v1574
        %v1576 = vpop.f32.mrb[0].mxu0
        %v1577 = vpop.f32.mrb[0].mxu0
        %v1578 = vadd.f32 0.0, %v1577
        %v1579 = vpop.f32.mrb[0].mxu0
        %1580 = vmatprep.mubr.bf16.mxu0 %v1499
        %1581 = vmatmul.mubr.bf16.gmra.mrb[0].mxu0 %v1498
        %v1582 = vpop.f32.mrb[0].mxu0
        %v1583 = vadd.f32 0.0, %v1582
        %v1584 = vpop.f32.mrb[0].mxu0
        %v1585 = vpop.f32.mrb[0].mxu0
        %v1586 = vadd.f32 0.0, %v1585
        %v1587 = vpop.f32.mrb[0].mxu0
        %1588 = vmatprep.mubr.bf16.mxu0 %v1501
        %1589 = vmatmul.mubr.bf16.gmra.mrb[0].mxu0 %v1500
        %v1590 = vpop.f32.mrb[0].mxu0
        %v1591 = vadd.f32 0.0, %v1590
        %v1592 = vpop.f32.mrb[0].mxu0
        %v1593 = vpop.f32.mrb[0].mxu0
        %v1594 = vadd.f32 0.0, %v1593
        %v1595 = vpop.f32.mrb[0].mxu0
        %1596 = vmatprep.mubr.bf16.mxu0 %v1503
        %1597 = vmatmul.mubr.bf16.gmra.mrb[0].mxu0 %v1502
        %v1598 = vpop.f32.mrb[0].mxu0
        %v1599 = vadd.f32 0.0, %v1598
        %v1600 = vpop.f32.mrb[0].mxu0
        %v1601 = vpop.f32.mrb[0].mxu0
        %v1602 = vadd.f32 0.0, %v1601
        %v1603 = vpop.f32.mrb[0].mxu0
        %1604 = vmatprep.mubr.bf16.mxu0 %v1505
        %1605 = vmatmul.mubr.bf16.gmra.mrb[0].mxu0 %v1504
        %v1606 = vpop.f32.mrb[0].mxu0
        %v1607 = vadd.f32 0.0, %v1606
        %v1608 = vpop.f32.mrb[0].mxu0
        %v1609 = vpop.f32.mrb[0].mxu0
        %v1610 = vadd.f32 0.0, %v1609
        %v1611 = vpop.f32.mrb[0].mxu0
        %1612 = vmatprep.mubr.bf16.mxu0 %v1507
        %1613 = vmatmul.mubr.bf16.gmra.mrb[0].mxu0 %v1506
        %v1614 = vpop.f32.mrb[0].mxu0
        %v1615 = vadd.f32 0.0, %v1614
        %v1616 = vpop.f32.mrb[0].mxu0
        %v1617 = vpop.f32.mrb[0].mxu0
        %v1618 = vadd.f32 0.0, %v1617
        %v1619 = vpop.f32.mrb[0].mxu0
        %1620 = vdwg.mxu0
        %v1621 = vld [vmem:[#allocation2] sm:$0xff]
        %v1622 = vld [vmem:[#allocation2 + $0x8] sm:$0xff]
        %v1623 = vld [vmem:[#allocation2 + $0x10] sm:$0xff]
        %v1624 = vld [vmem:[#allocation2 + $0x18] sm:$0xff]
        %v1625 = vld [vmem:[#allocation2 + $0x20] sm:$0xff]
        %v1626 = vld [vmem:[#allocation2 + $0x28] sm:$0xff]
        %v1627 = vld [vmem:[#allocation2 + $0x30] sm:$0xff]
        %v1628 = vld [vmem:[#allocation2 + $0x38] sm:$0xff]
        %v1629 = vld [vmem:[#allocation2 + $0x40] sm:$0xff]
        %v1630 = vld [vmem:[#allocation2 + $0x48] sm:$0xff]
        %v1631 = vld [vmem:[#allocation2 + $0x50] sm:$0xff]
        %v1632 = vld [vmem:[#allocation2 + $0x58] sm:$0xff]
        %v1633 = vld [vmem:[#allocation2 + $0x60] sm:$0xff]
        %v1634 = vld [vmem:[#allocation2 + $0x68] sm:$0xff]
        %v1635 = vld [vmem:[#allocation2 + $0x70] sm:$0xff]
        %v1636 = vld [vmem:[#allocation2 + $0x78] sm:$0xff]
        %v1637 = vstv %s485
        %v1638 = vmul.f32 %v1637, %v1476
        %v1639 = vmul.f32 %v1637, %v1477
        %v1640 = vmul.f32 %v1637, %v1478
        %v1641 = vmul.f32 %v1637, %v1479
        %v1642 = vmul.f32 %v1637, %v1480
        %v1643 = vmul.f32 %v1637, %v1481
        %v1644 = vmul.f32 %v1637, %v1482
        %v1645 = vmul.f32 %v1637, %v1483
        %v1646 = vmul.f32 %v1637, %v1484
        %v1647 = vmul.f32 %v1637, %v1485
        %v1648 = vmul.f32 %v1637, %v1486
        %v1649 = vmul.f32 %v1637, %v1487
        %v1650 = vmul.f32 %v1637, %v1488
        %v1651 = vmul.f32 %v1637, %v1489
        %v1652 = vmul.f32 %v1637, %v1490
        %v1653 = vmul.f32 %v1637, %v1491
        %v1654 = vmul.f32 %v1638, %v1559
        %v1655 = vmul.f32 %v1639, %v1562
        %v1656 = vmul.f32 %v1640, %v1567
        %v1657 = vmul.f32 %v1641, %v1570
        %v1658 = vmul.f32 %v1642, %v1575
        %v1659 = vmul.f32 %v1643, %v1578
        %v1660 = vmul.f32 %v1644, %v1583
        %v1661 = vmul.f32 %v1645, %v1586
        %v1662 = vmul.f32 %v1646, %v1591
        %v1663 = vmul.f32 %v1647, %v1594
        %v1664 = vmul.f32 %v1648, %v1599
        %v1665 = vmul.f32 %v1649, %v1602
        %v1666 = vmul.f32 %v1650, %v1607
        %v1667 = vmul.f32 %v1651, %v1610
        %v1668 = vmul.f32 %v1652, %v1615
        %v1669 = vmul.f32 %v1653, %v1618
        %v1670 = vadd.f32 %v1621, %v1654
        %v1671 = vadd.f32 %v1622, %v1655
        %v1672 = vadd.f32 %v1623, %v1656
        %v1673 = vadd.f32 %v1624, %v1657
        %v1674 = vadd.f32 %v1625, %v1658
        %v1675 = vadd.f32 %v1626, %v1659
        %v1676 = vadd.f32 %v1627, %v1660
        %v1677 = vadd.f32 %v1628, %v1661
        %v1678 = vadd.f32 %v1629, %v1662
        %v1679 = vadd.f32 %v1630, %v1663
        %v1680 = vadd.f32 %v1631, %v1664
        %v1681 = vadd.f32 %v1632, %v1665
        %v1682 = vadd.f32 %v1633, %v1666
        %v1683 = vadd.f32 %v1634, %v1667
        %v1684 = vadd.f32 %v1635, %v1668
        %v1685 = vadd.f32 %v1636, %v1669
        %1686 = vst [vmem:[#allocation2] sm:$0xff] %v1670
        %1687 = vst [vmem:[#allocation2 + $0x8] sm:$0xff] %v1671
        %1688 = vst [vmem:[#allocation2 + $0x10] sm:$0xff] %v1672
        %1689 = vst [vmem:[#allocation2 + $0x18] sm:$0xff] %v1673
        %1690 = vst [vmem:[#allocation2 + $0x20] sm:$0xff] %v1674
        %1691 = vst [vmem:[#allocation2 + $0x28] sm:$0xff] %v1675
        %1692 = vst [vmem:[#allocation2 + $0x30] sm:$0xff] %v1676
        %1693 = vst [vmem:[#allocation2 + $0x38] sm:$0xff] %v1677
        %1694 = vst [vmem:[#allocation2 + $0x40] sm:$0xff] %v1678
        %1695 = vst [vmem:[#allocation2 + $0x48] sm:$0xff] %v1679
        %1696 = vst [vmem:[#allocation2 + $0x50] sm:$0xff] %v1680
        %1697 = vst [vmem:[#allocation2 + $0x58] sm:$0xff] %v1681
        %1698 = vst [vmem:[#allocation2 + $0x60] sm:$0xff] %v1682
        %1699 = vst [vmem:[#allocation2 + $0x68] sm:$0xff] %v1683
        %1700 = vst [vmem:[#allocation2 + $0x70] sm:$0xff] %v1684
        %1701 = vst [vmem:[#allocation2 + $0x78] sm:$0xff] %v1685
        %p1702 = scmp.eq.s32.totalorder %s37, 2
        // Predicated region
        $region73: #{tpu_custom_call.1} parent=43 // pred_check
          %p1703 = pneg %p1702
        $region74: #{tpu_custom_call.1} parent=43 // pred_check_branch
          %1705 = sbr.rel (%p1703) target = $region76
        $region75: #{tpu_custom_call.1} parent=43 // pred_region
          %v1706 = vld [vmem:[#allocation2] sm:$0xff]
          %v1707 = vld [vmem:[#allocation2 + $0x8] sm:$0xff]
          %v1708 = vld [vmem:[#allocation2 + $0x10] sm:$0xff]
          %v1709 = vld [vmem:[#allocation2 + $0x18] sm:$0xff]
          %v1710 = vld [vmem:[#allocation2 + $0x20] sm:$0xff]
          %v1711 = vld [vmem:[#allocation2 + $0x28] sm:$0xff]
          %v1712 = vld [vmem:[#allocation2 + $0x30] sm:$0xff]
          %v1713 = vld [vmem:[#allocation2 + $0x38] sm:$0xff]
          %v1714 = vld [vmem:[#allocation2 + $0x40] sm:$0xff]
          %v1715 = vld [vmem:[#allocation2 + $0x48] sm:$0xff]
          %v1716 = vld [vmem:[#allocation2 + $0x50] sm:$0xff]
          %v1717 = vld [vmem:[#allocation2 + $0x58] sm:$0xff]
          %v1718 = vld [vmem:[#allocation2 + $0x60] sm:$0xff]
          %v1719 = vld [vmem:[#allocation2 + $0x68] sm:$0xff]
          %v1720 = vld [vmem:[#allocation2 + $0x70] sm:$0xff]
          %v1721 = vld [vmem:[#allocation2 + $0x78] sm:$0xff]
          %1722 = vst [vmem:[%s461] sm:$0xff] %v1706
          %1723 = vst [vmem:[%s461 + $0x8] sm:$0xff] %v1707
          %1724 = vst [vmem:[%s461 + $0x10] sm:$0xff] %v1708
          %1725 = vst [vmem:[%s461 + $0x18] sm:$0xff] %v1709
          %1726 = vst [vmem:[%s461 + $0x20] sm:$0xff] %v1710
          %1727 = vst [vmem:[%s461 + $0x28] sm:$0xff] %v1711
          %1728 = vst [vmem:[%s461 + $0x30] sm:$0xff] %v1712
          %1729 = vst [vmem:[%s461 + $0x38] sm:$0xff] %v1713
          %1730 = vst [vmem:[%s461 + $0x40] sm:$0xff] %v1714
          %1731 = vst [vmem:[%s461 + $0x48] sm:$0xff] %v1715
          %1732 = vst [vmem:[%s461 + $0x50] sm:$0xff] %v1716
          %1733 = vst [vmem:[%s461 + $0x58] sm:$0xff] %v1717
          %1734 = vst [vmem:[%s461 + $0x60] sm:$0xff] %v1718
          %1735 = vst [vmem:[%s461 + $0x68] sm:$0xff] %v1719
          %1736 = vst [vmem:[%s461 + $0x70] sm:$0xff] %v1720
          %1737 = vst [vmem:[%s461 + $0x78] sm:$0xff] %v1721
        $region76: #{tpu_custom_call.1} parent=43 // pred_fallthru
          _
        %s1738 = sand.u32 %s212, 1
        %s1739 = scalar_lea.sflag [#allocation5], %s1738
        %s1740 = sand.u32 %s212, 1
        %s1741 = smul.addr %s1740, 128
        %s1742 = scalar_lea.vmem [#allocation14], %s1741
        // Predicated region
        $region77: #{tpu_custom_call.1} parent=43 // pred_check
          %p1743 = pneg %p222
        $region78: #{tpu_custom_call.1} parent=43 // pred_check_branch
          %1745 = sbr.rel (%p1743) target = $region80
        $region79: #{tpu_custom_call.1} parent=43 // pred_region
          %s1746 = smul.u32 16, %s36
          %s1748 = ssub.s32 2048, 2048
          %1749 = vsyncadd %s1739, %s1748
          %s1750 = smul.addr %s35, 32
          %s1751 = sadd.s32 %s1746, %s1750
          %s1752 = smul.addr %s1751, 128
          %s1753 = scalar_lea.hbm %s6, %s1752
          %s1754 = sshll.u32 %s1742, 4
          %s1755 = int_to_ptr.vmem [resolvable:$true] %s1754
          %1760 = dma.vmem_to_hbm [thread:$0]  %s1755, 2048, %s1753, %s1739, 128, 128, 8
        $region80: #{tpu_custom_call.1} parent=43 // pred_fallthru
          _
      $region44: #{tpu_custom_call.1} parent=5 // pred_fallthru
        _
      %p1761 = scmp.le.s32.totalorder 2, %s25
      // Predicated region
      $region81: #{tpu_custom_call.1} parent=5 // pred_check
        %p1762 = pneg %p1761
      $region82: #{tpu_custom_call.1} parent=5 // pred_check_branch
        %1764 = sbr.rel (%p1762) target = $region84
      $region83: #{tpu_custom_call.1} parent=5 // pred_region
        %s1765 = ssub.s32 %s25, 2
        // Predicated region
        $region85: #{tpu_custom_call.1} parent=83 // pred_check
          %p1766 = pneg %p228
        $region86: #{tpu_custom_call.1} parent=83 // pred_check_branch
          %1768 = sbr.rel (%p1766) target = $region88
        $region87: #{tpu_custom_call.1} parent=83 // pred_region
          %s1769 = sand.u32 %s213, 1
          %s1770 = scalar_lea.sflag [#allocation5], %s1769
          %s1771 = sand.u32 %s213, 1
          %s1772 = smul.addr %s1771, 128
          %s1773 = scalar_lea.vmem [#allocation14], %s1772
          %1774 = dma.done %s1770, 2048
        $region88: #{tpu_custom_call.1} parent=83 // pred_fallthru
          _
      $region84: #{tpu_custom_call.1} parent=5 // pred_fallthru
        _
    $region6: #{tpu_custom_call.1} parent=1 // loop_footer
      %s29 = sadd.s32 1, %s25
    $region7: #{tpu_custom_call.1} parent=1 // loop_footer_branch
      %24 = sbr.rel target = $region3
    $region8: #{tpu_custom_call.1} parent=1 // loop_exit
      _
    %1775 = vsyncpa [#allocation4], 1
    %s1776 = scalar_lea.sflag [#allocation4], 1
    %1777 = vsyncpa %s1776, 1
    %1778 = vsyncpa [#allocation9], 1
    %s1779 = scalar_lea.sflag [#allocation9], 1
    %1780 = vsyncpa %s1779, 1
    %1781 = vsyncpa [#allocation12], 1
    %s1782 = scalar_lea.sflag [#allocation12], 1
    %1783 = vsyncpa %s1782, 1
    %1784 = vsyncpa [#allocation5], 1
    %s1785 = scalar_lea.sflag [#allocation5], 1
    %1786 = vsyncpa %s1785, 1
    %1787 = vsyncpa [#allocation6], 1
    %s1788 = scalar_lea.sflag [#allocation6], 1
    %1789 = vsyncpa %s1788, 1

</llo_original>
